<compile_context>
chip_gen: v6e
topology: v6e:2x2x1
jax: 0.10.0
libtpu: 0.0.40
codegen_flags: <defaults>
</compile_context>

<pallas_src>
import jax
import jax.numpy as jnp
from jax.experimental import pallas as pl
from jax.experimental.pallas import tpu as pltpu


# ----------------------------------------------------------------------------
# Fused kernel: whole decoder forward as 17 small MXU matmuls in VMEM.
# ----------------------------------------------------------------------------
def _decoder_kernel(x2_ref, s2_ref, k_ref, m_ref, z_ref,
                    t1s_ref, t1u_ref, t2_ref, vec_ref, o_ref):
    dot = lambda a, b: jnp.dot(a, b, preferred_element_type=jnp.float32)

    x2 = x2_ref[...]          # (Nb*H,  W*Ci)   deep feature
    s2 = s2_ref[...]          # (Nb*OH, OW*Cs)  skip feature
    vec = vec_ref[...]        # (5, OW*Co): up-bias, bn1 scale/shift, bn2 scale/shift

    # ConvTranspose2d(k=2,s=2) + bilinear resize (align_corners=True),
    # both folded into row operator K and lane operator M per parity phase.
    r = dot(k_ref[0], dot(x2, m_ref[0])) + dot(k_ref[1], dot(x2, m_ref[1]))
    r = r + vec[0:1, :]

    # Conv3x3 #1 on concat([x_copy, r]) (weight split: T1s skip / T1u up),
    # vertical taps via banded row-shift matmuls, then BN + ReLU.
    pre1 = dot(z_ref[0], dot(s2, t1s_ref[0]) + dot(r, t1u_ref[0]))
    pre1 = pre1 + dot(s2, t1s_ref[1]) + dot(r, t1u_ref[1])
    pre1 = pre1 + dot(z_ref[1], dot(s2, t1s_ref[2]) + dot(r, t1u_ref[2]))
    h1 = jnp.maximum(pre1 * vec[1:2, :] + vec[2:3, :], 0.0)

    # Conv3x3 #2 + BN + ReLU.
    pre2 = dot(z_ref[0], dot(h1, t2_ref[0]))
    pre2 = pre2 + dot(h1, t2_ref[1])
    pre2 = pre2 + dot(z_ref[1], dot(h1, t2_ref[2]))
    out = jnp.maximum(pre2 * vec[3:4, :] + vec[4:5, :], 0.0)

    o_ref[...] = out.astype(o_ref.dtype)


# ----------------------------------------------------------------------------
# Operator construction (wrapper side, tiny XLA ops, jit-fused with the call).
# ----------------------------------------------------------------------------
def _resize_matrix(out_size, in_size):
    """Row-stochastic bilinear resize matrix, align_corners=True (PyTorch)."""
    if out_size == 1 or in_size == 1:
        src = jnp.zeros((out_size,), jnp.float32)
    else:
        src = jnp.arange(out_size, dtype=jnp.float32) * (in_size - 1) / (out_size - 1)
    lo = jnp.clip(jnp.floor(src).astype(jnp.int32), 0, in_size - 1)
    hi = jnp.clip(lo + 1, 0, in_size - 1)
    frac = src - lo.astype(jnp.float32)
    return (jax.nn.one_hot(lo, in_size, dtype=jnp.float32) * (1.0 - frac)[:, None]
            + jax.nn.one_hot(hi, in_size, dtype=jnp.float32) * frac[:, None])


def _conv_tap_operators(wt, cin, cout, ow):
    """wt: (cout, cin, 3, 3) -> (3, ow*cin, ow*cout).

    For each vertical tap dy, the horizontal taps dx (with zero padding at the
    W edges) and the channel mixing are folded into one banded lane operator.
    """
    mats = []
    for dy in range(3):
        acc = jnp.zeros((ow * cin, ow * cout), jnp.float32)
        for dx in range(3):
            shift = jnp.eye(ow, ow, k=1 - dx, dtype=jnp.float32)
            acc = acc + jnp.kron(shift, jnp.transpose(wt[:, :, dy, dx]))
        mats.append(acc)
    return jnp.stack(mats)


@jax.jit
def decoder_forward(params, x_copy, x):
    """NCHW in / NCHW out; matches decoder.forward(x_copy, x, interpolate=True)."""
    x = x.astype(jnp.float32)
    x_copy = x_copy.astype(jnp.float32)
    nb, ci, h, w = x.shape
    _, cs, oh, ow = x_copy.shape
    co = params["up_b"].shape[0]
    assert cs + co == params["c1_w"].shape[1], "concat channels must feed conv1"

    # 2-D activation layouts: rows = (n, image-row), lanes = (image-col, channel)
    x2 = jnp.transpose(x, (0, 2, 3, 1)).reshape(nb * h, w * ci)
    s2 = jnp.transpose(x_copy, (0, 2, 3, 1)).reshape(nb * oh, ow * cs)

    # Bilinear resize operators on the 2x up-sampled grid, split by parity phase
    # (exact identity selectors when the resize is a no-op).
    ah = _resize_matrix(oh, 2 * h)
    aw = _resize_matrix(ow, 2 * w)
    ah_p = jnp.stack([ah[:, 0::2], ah[:, 1::2]])      # (2, oh, h)
    aw_p = jnp.stack([aw[:, 0::2], aw[:, 1::2]])      # (2, ow, w)

    eye_n = jnp.eye(nb, dtype=jnp.float32)
    k_op = jnp.stack([jnp.kron(eye_n, ah_p[0]), jnp.kron(eye_n, ah_p[1])])

    up_w = params["up_w"].astype(jnp.float32)          # (ci, co, 2, 2)
    m_op = jnp.stack([
        jnp.einsum("cdj,jow->wcod", up_w[:, :, ki, :], aw_p).reshape(w * ci, ow * co)
        for ki in range(2)])                            # (2, w*ci, ow*co)

    # Vertical conv-tap row shifts (zero padded, block-diagonal per image).
    z_op = jnp.stack([jnp.kron(eye_n, jnp.eye(oh, oh, k=-1, dtype=jnp.float32)),
                      jnp.kron(eye_n, jnp.eye(oh, oh, k=1, dtype=jnp.float32))])

    w1 = params["c1_w"].astype(jnp.float32)
    w2 = params["c2_w"].astype(jnp.float32)
    t1s = _conv_tap_operators(w1[:, :cs], cs, co, ow)   # conv1, skip channels
    t1u = _conv_tap_operators(w1[:, cs:], co, co, ow)   # conv1, upsampled channels
    t2 = _conv_tap_operators(w2, co, co, ow)            # conv2

    eps = 1e-5
    sc1 = params["bn1_g"] / jnp.sqrt(params["bn1_v"] + eps)
    sh1 = params["c1_b"] * sc1 + params["bn1_b"] - params["bn1_m"] * sc1
    sc2 = params["bn2_g"] / jnp.sqrt(params["bn2_v"] + eps)
    sh2 = params["c2_b"] * sc2 + params["bn2_b"] - params["bn2_m"] * sc2
    vec = jnp.stack([jnp.tile(params["up_b"].astype(jnp.float32), ow),
                     jnp.tile(sc1, ow), jnp.tile(sh1, ow),
                     jnp.tile(sc2, ow), jnp.tile(sh2, ow)])   # (5, ow*co)

    operands = (x2, s2, k_op, m_op, z_op, t1s, t1u, t2, vec)
    in_specs = [pl.BlockSpec(a.shape, lambda i, nd=a.ndim: (0,) * nd)
                for a in operands]

    out2 = pl.pallas_call(
        _decoder_kernel,
        out_shape=jax.ShapeDtypeStruct((nb * oh, ow * co), jnp.float32),
        grid_spec=pltpu.PrefetchScalarGridSpec(
            num_scalar_prefetch=0,
            grid=(1,),
            in_specs=in_specs,
            out_specs=pl.BlockSpec((nb * oh, ow * co), lambda i: (0, 0)),
        ),
        compiler_params=pltpu.CompilerParams(dimension_semantics=("arbitrary",)),
    )(*operands)

    out = out2.reshape(nb, oh, ow, co)
    return jnp.transpose(out, (0, 3, 1, 2))               # back to NCHW


# ----------------------------------------------------------------------------
# Pure-XLA reference (for an in-script self-check) and parameter init.
# ----------------------------------------------------------------------------
def _reference_forward(params, x_copy, x):
    nb, ci, h, w = x.shape
    _, cs, oh, ow = x_copy.shape
    co = params["up_b"].shape[0]
    up = jnp.einsum("nchw,cdij->ndhiwj", x, params["up_w"]).reshape(nb, co, 2 * h, 2 * w)
    up = up + params["up_b"][None, :, None, None]
    ah = _resize_matrix(oh, 2 * h)
    aw = _resize_matrix(ow, 2 * w)
    up = jnp.einsum("oy,ncyx,px->ncop", ah, up, aw)
    t = jnp.concatenate([x_copy, up], axis=1)

    def conv_bn_relu(t, wt, b, g, beta, m, v):
        y = jax.lax.conv_general_dilated(
            t, wt, window_strides=(1, 1), padding=((1, 1), (1, 1)),
            dimension_numbers=("NCHW", "OIHW", "NCHW"))
        s = g / jnp.sqrt(v + 1e-5)
        y = (y + b[None, :, None, None]) * s[None, :, None, None]
        y = y + (beta - m * s)[None, :, None, None]
        return jnp.maximum(y, 0.0)

    t = conv_bn_relu(t, params["c1_w"], params["c1_b"], params["bn1_g"],
                     params["bn1_b"], params["bn1_m"], params["bn1_v"])
    t = conv_bn_relu(t, params["c2_w"], params["c2_b"], params["bn2_g"],
                     params["bn2_b"], params["bn2_m"], params["bn2_v"])
    return t


def init_params(key, in_channels, out_channels):
    ks = jax.random.split(key, 10)
    return {
        # ConvTranspose2d weight: (in, out, 2, 2)
        "up_w": 0.1 * jax.random.normal(ks[0], (in_channels, out_channels, 2, 2), jnp.float32),
        "up_b": 0.1 * jax.random.normal(ks[1], (out_channels,), jnp.float32),
        # Conv2d(in_channels -> out_channels, 3x3)
        "c1_w": 0.1 * jax.random.normal(ks[2], (out_channels, in_channels, 3, 3), jnp.float32),
        "c1_b": 0.1 * jax.random.normal(ks[3], (out_channels,), jnp.float32),
        "bn1_g": 1.0 + 0.1 * jax.random.normal(ks[4], (out_channels,), jnp.float32),
        "bn1_b": 0.1 * jax.random.normal(ks[5], (out_channels,), jnp.float32),
        "bn1_m": jnp.zeros((out_channels,), jnp.float32),
        "bn1_v": jnp.ones((out_channels,), jnp.float32),
        # Conv2d(out_channels -> out_channels, 3x3)
        "c2_w": 0.1 * jax.random.normal(ks[6], (out_channels, out_channels, 3, 3), jnp.float32),
        "c2_b": 0.1 * jax.random.normal(ks[7], (out_channels,), jnp.float32),
        "bn2_g": 1.0 + 0.1 * jax.random.normal(ks[8], (out_channels,), jnp.float32),
        "bn2_b": 0.1 * jax.random.normal(ks[9], (out_channels,), jnp.float32),
        "bn2_m": jnp.zeros((out_channels,), jnp.float32),
        "bn2_v": jnp.ones((out_channels,), jnp.float32),
    }


if __name__ == "__main__":
    in_channels, out_channels = 8, 4
    key = jax.random.PRNGKey(0)
    kp, kx, kc = jax.random.split(key, 3)

    params = init_params(kp, in_channels, out_channels)

    # deep feature x: (N, in_ch, 8, 8); skip x_copy: (N, in_ch - out_ch, 16, 16)
    x = jax.random.normal(kx, (2, in_channels, 8, 8), jnp.float32)
    x_copy = jax.random.normal(kc, (2, in_channels - out_channels, 16, 16), jnp.float32)

    out = decoder_forward(params, x_copy, x)
    out = jax.block_until_ready(out)
    assert out.shape == (2, out_channels, 16, 16)

    ref = _reference_forward(params, x_copy, x)
    err = float(jnp.max(jnp.abs(out - ref)))
    assert err < 1e-1, f"kernel/reference mismatch, max abs err = {err}"

    print("KERNEL_OK")
</pallas_src>

<mosaic_0001>
module attributes {stable_mosaic.version = 11 : i64} {
  func.func @_decoder_kernel(%arg0: i32, %arg1: memref<16x64xf32, #tpu.memory_space<vmem>>, %arg2: memref<32x64xf32, #tpu.memory_space<vmem>>, %arg3: memref<2x32x16xf32, #tpu.memory_space<vmem>>, %arg4: memref<2x64x64xf32, #tpu.memory_space<vmem>>, %arg5: memref<2x32x32xf32, #tpu.memory_space<vmem>>, %arg6: memref<3x64x64xf32, #tpu.memory_space<vmem>>, %arg7: memref<3x64x64xf32, #tpu.memory_space<vmem>>, %arg8: memref<3x64x64xf32, #tpu.memory_space<vmem>>, %arg9: memref<5x64xf32, #tpu.memory_space<vmem>>, %arg10: memref<32x64xf32, #tpu.memory_space<vmem>>) attributes {dimension_semantics = [#tpu.dimension_semantics<arbitrary>], iteration_bounds = array<i64: 1>, scalar_prefetch = 0 : i64, scratch_operands = 0 : i64, tpu.core_type = #tpu.core_type<tc>, window_params = [{pipeline_mode = #tpu.pipeline_mode<synchronous>, transform_indices = @transform_0, window_bounds = array<i64: 16, 64>}, {pipeline_mode = #tpu.pipeline_mode<synchronous>, transform_indices = @transform_1, window_bounds = array<i64: 32, 64>}, {pipeline_mode = #tpu.pipeline_mode<synchronous>, transform_indices = @transform_2, window_bounds = array<i64: 2, 32, 16>}, {pipeline_mode = #tpu.pipeline_mode<synchronous>, transform_indices = @transform_3, window_bounds = array<i64: 2, 64, 64>}, {pipeline_mode = #tpu.pipeline_mode<synchronous>, transform_indices = @transform_4, window_bounds = array<i64: 2, 32, 32>}, {pipeline_mode = #tpu.pipeline_mode<synchronous>, transform_indices = @transform_5, window_bounds = array<i64: 3, 64, 64>}, {pipeline_mode = #tpu.pipeline_mode<synchronous>, transform_indices = @transform_6, window_bounds = array<i64: 3, 64, 64>}, {pipeline_mode = #tpu.pipeline_mode<synchronous>, transform_indices = @transform_7, window_bounds = array<i64: 3, 64, 64>}, {pipeline_mode = #tpu.pipeline_mode<synchronous>, transform_indices = @transform_8, window_bounds = array<i64: 5, 64>}, {pipeline_mode = #tpu.pipeline_mode<synchronous>, transform_indices = @transform_9, window_bounds = array<i64: 32, 64>}]} {
    %c0 = arith.constant 0 : index
    %c0_0 = arith.constant 0 : index
    %0 = vector.load %arg1[%c0, %c0_0] : memref<16x64xf32, #tpu.memory_space<vmem>>, vector<16x64xf32>
    %c0_1 = arith.constant 0 : index
    %c0_2 = arith.constant 0 : index
    %1 = vector.load %arg2[%c0_1, %c0_2] : memref<32x64xf32, #tpu.memory_space<vmem>>, vector<32x64xf32>
    %c0_3 = arith.constant 0 : index
    %c0_4 = arith.constant 0 : index
    %2 = vector.load %arg9[%c0_3, %c0_4] : memref<5x64xf32, #tpu.memory_space<vmem>>, vector<5x64xf32>
    %c0_5 = arith.constant 0 : index
    %c0_6 = arith.constant 0 : index
    %c0_7 = arith.constant 0 : index
    %3 = vector.load %arg3[%c0_5, %c0_6, %c0_7] : memref<2x32x16xf32, #tpu.memory_space<vmem>>, vector<1x32x16xf32>
    %4 = vector.shape_cast %3 : vector<1x32x16xf32> to vector<32x16xf32>
    %c0_8 = arith.constant 0 : index
    %c0_9 = arith.constant 0 : index
    %c0_10 = arith.constant 0 : index
    %5 = vector.load %arg4[%c0_8, %c0_9, %c0_10] : memref<2x64x64xf32, #tpu.memory_space<vmem>>, vector<1x64x64xf32>
    %6 = vector.shape_cast %5 : vector<1x64x64xf32> to vector<64x64xf32>
    %cst = arith.constant dense<0.000000e+00> : vector<16x64xf32>
    %7 = tpu.matmul %0, %6, %cst {dimension_numbers = #tpu.dot_dimension_numbers<[1], [0], [0], [1], [0, 0, 1, 1], [], []>} : vector<16x64xf32>, vector<64x64xf32>, vector<16x64xf32> -> vector<16x64xf32>
    %cst_11 = arith.constant dense<0.000000e+00> : vector<32x64xf32>
    %8 = tpu.matmul %4, %7, %cst_11 {dimension_numbers = #tpu.dot_dimension_numbers<[1], [0], [0], [1], [0, 0, 1, 1], [], []>} : vector<32x16xf32>, vector<16x64xf32>, vector<32x64xf32> -> vector<32x64xf32>
    %c1 = arith.constant 1 : index
    %c0_12 = arith.constant 0 : index
    %c0_13 = arith.constant 0 : index
    %9 = vector.load %arg3[%c1, %c0_12, %c0_13] : memref<2x32x16xf32, #tpu.memory_space<vmem>>, vector<1x32x16xf32>
    %10 = vector.shape_cast %9 : vector<1x32x16xf32> to vector<32x16xf32>
    %c1_14 = arith.constant 1 : index
    %c0_15 = arith.constant 0 : index
    %c0_16 = arith.constant 0 : index
    %11 = vector.load %arg4[%c1_14, %c0_15, %c0_16] : memref<2x64x64xf32, #tpu.memory_space<vmem>>, vector<1x64x64xf32>
    %12 = vector.shape_cast %11 : vector<1x64x64xf32> to vector<64x64xf32>
    %cst_17 = arith.constant dense<0.000000e+00> : vector<16x64xf32>
    %13 = tpu.matmul %0, %12, %cst_17 {dimension_numbers = #tpu.dot_dimension_numbers<[1], [0], [0], [1], [0, 0, 1, 1], [], []>} : vector<16x64xf32>, vector<64x64xf32>, vector<16x64xf32> -> vector<16x64xf32>
    %cst_18 = arith.constant dense<0.000000e+00> : vector<32x64xf32>
    %14 = tpu.matmul %10, %13, %cst_18 {dimension_numbers = #tpu.dot_dimension_numbers<[1], [0], [0], [1], [0, 0, 1, 1], [], []>} : vector<32x16xf32>, vector<16x64xf32>, vector<32x64xf32> -> vector<32x64xf32>
    %15 = arith.addf %8, %14 : vector<32x64xf32>
    %16 = vector.extract_strided_slice %2 {offsets = [0, 0], sizes = [1, 64], strides = [1, 1]} : vector<5x64xf32> to vector<1x64xf32>
    %17 = vector.broadcast %16 : vector<1x64xf32> to vector<32x64xf32>
    %18 = arith.addf %15, %17 : vector<32x64xf32>
    %c0_19 = arith.constant 0 : index
    %c0_20 = arith.constant 0 : index
    %c0_21 = arith.constant 0 : index
    %19 = vector.load %arg5[%c0_19, %c0_20, %c0_21] : memref<2x32x32xf32, #tpu.memory_space<vmem>>, vector<1x32x32xf32>
    %20 = vector.shape_cast %19 : vector<1x32x32xf32> to vector<32x32xf32>
    %c0_22 = arith.constant 0 : index
    %c0_23 = arith.constant 0 : index
    %c0_24 = arith.constant 0 : index
    %21 = vector.load %arg6[%c0_22, %c0_23, %c0_24] : memref<3x64x64xf32, #tpu.memory_space<vmem>>, vector<1x64x64xf32>
    %22 = vector.shape_cast %21 : vector<1x64x64xf32> to vector<64x64xf32>
    %cst_25 = arith.constant dense<0.000000e+00> : vector<32x64xf32>
    %23 = tpu.matmul %1, %22, %cst_25 {dimension_numbers = #tpu.dot_dimension_numbers<[1], [0], [0], [1], [0, 0, 1, 1], [], []>} : vector<32x64xf32>, vector<64x64xf32>, vector<32x64xf32> -> vector<32x64xf32>
    %c0_26 = arith.constant 0 : index
    %c0_27 = arith.constant 0 : index
    %c0_28 = arith.constant 0 : index
    %24 = vector.load %arg7[%c0_26, %c0_27, %c0_28] : memref<3x64x64xf32, #tpu.memory_space<vmem>>, vector<1x64x64xf32>
    %25 = vector.shape_cast %24 : vector<1x64x64xf32> to vector<64x64xf32>
    %cst_29 = arith.constant dense<0.000000e+00> : vector<32x64xf32>
    %26 = tpu.matmul %18, %25, %cst_29 {dimension_numbers = #tpu.dot_dimension_numbers<[1], [0], [0], [1], [0, 0, 1, 1], [], []>} : vector<32x64xf32>, vector<64x64xf32>, vector<32x64xf32> -> vector<32x64xf32>
    %27 = arith.addf %23, %26 : vector<32x64xf32>
    %cst_30 = arith.constant dense<0.000000e+00> : vector<32x64xf32>
    %28 = tpu.matmul %20, %27, %cst_30 {dimension_numbers = #tpu.dot_dimension_numbers<[1], [0], [0], [1], [0, 0, 1, 1], [], []>} : vector<32x32xf32>, vector<32x64xf32>, vector<32x64xf32> -> vector<32x64xf32>
    %c1_31 = arith.constant 1 : index
    %c0_32 = arith.constant 0 : index
    %c0_33 = arith.constant 0 : index
    %29 = vector.load %arg6[%c1_31, %c0_32, %c0_33] : memref<3x64x64xf32, #tpu.memory_space<vmem>>, vector<1x64x64xf32>
    %30 = vector.shape_cast %29 : vector<1x64x64xf32> to vector<64x64xf32>
    %cst_34 = arith.constant dense<0.000000e+00> : vector<32x64xf32>
    %31 = tpu.matmul %1, %30, %cst_34 {dimension_numbers = #tpu.dot_dimension_numbers<[1], [0], [0], [1], [0, 0, 1, 1], [], []>} : vector<32x64xf32>, vector<64x64xf32>, vector<32x64xf32> -> vector<32x64xf32>
    %32 = arith.addf %28, %31 : vector<32x64xf32>
    %c1_35 = arith.constant 1 : index
    %c0_36 = arith.constant 0 : index
    %c0_37 = arith.constant 0 : index
    %33 = vector.load %arg7[%c1_35, %c0_36, %c0_37] : memref<3x64x64xf32, #tpu.memory_space<vmem>>, vector<1x64x64xf32>
    %34 = vector.shape_cast %33 : vector<1x64x64xf32> to vector<64x64xf32>
    %cst_38 = arith.constant dense<0.000000e+00> : vector<32x64xf32>
    %35 = tpu.matmul %18, %34, %cst_38 {dimension_numbers = #tpu.dot_dimension_numbers<[1], [0], [0], [1], [0, 0, 1, 1], [], []>} : vector<32x64xf32>, vector<64x64xf32>, vector<32x64xf32> -> vector<32x64xf32>
    %36 = arith.addf %32, %35 : vector<32x64xf32>
    %c1_39 = arith.constant 1 : index
    %c0_40 = arith.constant 0 : index
    %c0_41 = arith.constant 0 : index
    %37 = vector.load %arg5[%c1_39, %c0_40, %c0_41] : memref<2x32x32xf32, #tpu.memory_space<vmem>>, vector<1x32x32xf32>
    %38 = vector.shape_cast %37 : vector<1x32x32xf32> to vector<32x32xf32>
    %c2 = arith.constant 2 : index
    %c0_42 = arith.constant 0 : index
    %c0_43 = arith.constant 0 : index
    %39 = vector.load %arg6[%c2, %c0_42, %c0_43] : memref<3x64x64xf32, #tpu.memory_space<vmem>>, vector<1x64x64xf32>
    %40 = vector.shape_cast %39 : vector<1x64x64xf32> to vector<64x64xf32>
    %cst_44 = arith.constant dense<0.000000e+00> : vector<32x64xf32>
    %41 = tpu.matmul %1, %40, %cst_44 {dimension_numbers = #tpu.dot_dimension_numbers<[1], [0], [0], [1], [0, 0, 1, 1], [], []>} : vector<32x64xf32>, vector<64x64xf32>, vector<32x64xf32> -> vector<32x64xf32>
    %c2_45 = arith.constant 2 : index
    %c0_46 = arith.constant 0 : index
    %c0_47 = arith.constant 0 : index
    %42 = vector.load %arg7[%c2_45, %c0_46, %c0_47] : memref<3x64x64xf32, #tpu.memory_space<vmem>>, vector<1x64x64xf32>
    %43 = vector.shape_cast %42 : vector<1x64x64xf32> to vector<64x64xf32>
    %cst_48 = arith.constant dense<0.000000e+00> : vector<32x64xf32>
    %44 = tpu.matmul %18, %43, %cst_48 {dimension_numbers = #tpu.dot_dimension_numbers<[1], [0], [0], [1], [0, 0, 1, 1], [], []>} : vector<32x64xf32>, vector<64x64xf32>, vector<32x64xf32> -> vector<32x64xf32>
    %45 = arith.addf %41, %44 : vector<32x64xf32>
    %cst_49 = arith.constant dense<0.000000e+00> : vector<32x64xf32>
    %46 = tpu.matmul %38, %45, %cst_49 {dimension_numbers = #tpu.dot_dimension_numbers<[1], [0], [0], [1], [0, 0, 1, 1], [], []>} : vector<32x32xf32>, vector<32x64xf32>, vector<32x64xf32> -> vector<32x64xf32>
    %47 = arith.addf %36, %46 : vector<32x64xf32>
    %48 = vector.extract_strided_slice %2 {offsets = [1, 0], sizes = [1, 64], strides = [1, 1]} : vector<5x64xf32> to vector<1x64xf32>
    %49 = vector.broadcast %48 : vector<1x64xf32> to vector<32x64xf32>
    %50 = arith.mulf %47, %49 : vector<32x64xf32>
    %51 = vector.extract_strided_slice %2 {offsets = [2, 0], sizes = [1, 64], strides = [1, 1]} : vector<5x64xf32> to vector<1x64xf32>
    %52 = vector.broadcast %51 : vector<1x64xf32> to vector<32x64xf32>
    %53 = arith.addf %50, %52 : vector<32x64xf32>
    %cst_50 = arith.constant 0.000000e+00 : f32
    %54 = vector.broadcast %cst_50 : f32 to vector<32x64xf32>
    %55 = arith.maximumf %53, %54 : vector<32x64xf32>
    %c0_51 = arith.constant 0 : index
    %c0_52 = arith.constant 0 : index
    %c0_53 = arith.constant 0 : index
    %56 = vector.load %arg5[%c0_51, %c0_52, %c0_53] : memref<2x32x32xf32, #tpu.memory_space<vmem>>, vector<1x32x32xf32>
    %57 = vector.shape_cast %56 : vector<1x32x32xf32> to vector<32x32xf32>
    %c0_54 = arith.constant 0 : index
    %c0_55 = arith.constant 0 : index
    %c0_56 = arith.constant 0 : index
    %58 = vector.load %arg8[%c0_54, %c0_55, %c0_56] : memref<3x64x64xf32, #tpu.memory_space<vmem>>, vector<1x64x64xf32>
    %59 = vector.shape_cast %58 : vector<1x64x64xf32> to vector<64x64xf32>
    %cst_57 = arith.constant dense<0.000000e+00> : vector<32x64xf32>
    %60 = tpu.matmul %55, %59, %cst_57 {dimension_numbers = #tpu.dot_dimension_numbers<[1], [0], [0], [1], [0, 0, 1, 1], [], []>} : vector<32x64xf32>, vector<64x64xf32>, vector<32x64xf32> -> vector<32x64xf32>
    %cst_58 = arith.constant dense<0.000000e+00> : vector<32x64xf32>
    %61 = tpu.matmul %57, %60, %cst_58 {dimension_numbers = #tpu.dot_dimension_numbers<[1], [0], [0], [1], [0, 0, 1, 1], [], []>} : vector<32x32xf32>, vector<32x64xf32>, vector<32x64xf32> -> vector<32x64xf32>
    %c1_59 = arith.constant 1 : index
    %c0_60 = arith.constant 0 : index
    %c0_61 = arith.constant 0 : index
    %62 = vector.load %arg8[%c1_59, %c0_60, %c0_61] : memref<3x64x64xf32, #tpu.memory_space<vmem>>, vector<1x64x64xf32>
    %63 = vector.shape_cast %62 : vector<1x64x64xf32> to vector<64x64xf32>
    %cst_62 = arith.constant dense<0.000000e+00> : vector<32x64xf32>
    %64 = tpu.matmul %55, %63, %cst_62 {dimension_numbers = #tpu.dot_dimension_numbers<[1], [0], [0], [1], [0, 0, 1, 1], [], []>} : vector<32x64xf32>, vector<64x64xf32>, vector<32x64xf32> -> vector<32x64xf32>
    %65 = arith.addf %61, %64 : vector<32x64xf32>
    %c1_63 = arith.constant 1 : index
    %c0_64 = arith.constant 0 : index
    %c0_65 = arith.constant 0 : index
    %66 = vector.load %arg5[%c1_63, %c0_64, %c0_65] : memref<2x32x32xf32, #tpu.memory_space<vmem>>, vector<1x32x32xf32>
    %67 = vector.shape_cast %66 : vector<1x32x32xf32> to vector<32x32xf32>
    %c2_66 = arith.constant 2 : index
    %c0_67 = arith.constant 0 : index
    %c0_68 = arith.constant 0 : index
    %68 = vector.load %arg8[%c2_66, %c0_67, %c0_68] : memref<3x64x64xf32, #tpu.memory_space<vmem>>, vector<1x64x64xf32>
    %69 = vector.shape_cast %68 : vector<1x64x64xf32> to vector<64x64xf32>
    %cst_69 = arith.constant dense<0.000000e+00> : vector<32x64xf32>
    %70 = tpu.matmul %55, %69, %cst_69 {dimension_numbers = #tpu.dot_dimension_numbers<[1], [0], [0], [1], [0, 0, 1, 1], [], []>} : vector<32x64xf32>, vector<64x64xf32>, vector<32x64xf32> -> vector<32x64xf32>
    %cst_70 = arith.constant dense<0.000000e+00> : vector<32x64xf32>
    %71 = tpu.matmul %67, %70, %cst_70 {dimension_numbers = #tpu.dot_dimension_numbers<[1], [0], [0], [1], [0, 0, 1, 1], [], []>} : vector<32x32xf32>, vector<32x64xf32>, vector<32x64xf32> -> vector<32x64xf32>
    %72 = arith.addf %65, %71 : vector<32x64xf32>
    %73 = vector.extract_strided_slice %2 {offsets = [3, 0], sizes = [1, 64], strides = [1, 1]} : vector<5x64xf32> to vector<1x64xf32>
    %74 = vector.broadcast %73 : vector<1x64xf32> to vector<32x64xf32>
    %75 = arith.mulf %72, %74 : vector<32x64xf32>
    %76 = vector.extract_strided_slice %2 {offsets = [4, 0], sizes = [1, 64], strides = [1, 1]} : vector<5x64xf32> to vector<1x64xf32>
    %77 = vector.broadcast %76 : vector<1x64xf32> to vector<32x64xf32>
    %78 = arith.addf %75, %77 : vector<32x64xf32>
    %cst_71 = arith.constant 0.000000e+00 : f32
    %79 = vector.broadcast %cst_71 : f32 to vector<32x64xf32>
    %80 = arith.maximumf %78, %79 : vector<32x64xf32>
    %c0_72 = arith.constant 0 : index
    %c0_73 = arith.constant 0 : index
    %81 = vector.load %arg10[%c0_72, %c0_73] : memref<32x64xf32, #tpu.memory_space<vmem>>, vector<32x64xf32>
    tpu.vector_store %arg10[%c0_72, %c0_73], %80 {strides = array<i32>} : memref<32x64xf32, #tpu.memory_space<vmem>>, vector<32x64xf32>,
    return
  }
  func.func @transform_0(%arg0: i32) -> (i32, i32) {
    %c0_i32 = arith.constant 0 : i32
    %c0_i32_0 = arith.constant 0 : i32
    %c0_i32_1 = arith.constant 0 : i32
    return %c0_i32, %c0_i32_0 : i32, i32
  }
  func.func @transform_1(%arg0: i32) -> (i32, i32) {
    %c0_i32 = arith.constant 0 : i32
    %c0_i32_0 = arith.constant 0 : i32
    %c0_i32_1 = arith.constant 0 : i32
    return %c0_i32, %c0_i32_0 : i32, i32
  }
  func.func @transform_2(%arg0: i32) -> (i32, i32, i32) {
    %c0_i32 = arith.constant 0 : i32
    %c0_i32_0 = arith.constant 0 : i32
    %c0_i32_1 = arith.constant 0 : i32
    %c0_i32_2 = arith.constant 0 : i32
    return %c0_i32, %c0_i32_0, %c0_i32_1 : i32, i32, i32
  }
  func.func @transform_3(%arg0: i32) -> (i32, i32, i32) {
    %c0_i32 = arith.constant 0 : i32
    %c0_i32_0 = arith.constant 0 : i32
    %c0_i32_1 = arith.constant 0 : i32
    %c0_i32_2 = arith.constant 0 : i32
    return %c0_i32, %c0_i32_0, %c0_i32_1 : i32, i32, i32
  }
  func.func @transform_4(%arg0: i32) -> (i32, i32, i32) {
    %c0_i32 = arith.constant 0 : i32
    %c0_i32_0 = arith.constant 0 : i32
    %c0_i32_1 = arith.constant 0 : i32
    %c0_i32_2 = arith.constant 0 : i32
    return %c0_i32, %c0_i32_0, %c0_i32_1 : i32, i32, i32
  }
  func.func @transform_5(%arg0: i32) -> (i32, i32, i32) {
    %c0_i32 = arith.constant 0 : i32
    %c0_i32_0 = arith.constant 0 : i32
    %c0_i32_1 = arith.constant 0 : i32
    %c0_i32_2 = arith.constant 0 : i32
    return %c0_i32, %c0_i32_0, %c0_i32_1 : i32, i32, i32
  }
  func.func @transform_6(%arg0: i32) -> (i32, i32, i32) {
    %c0_i32 = arith.constant 0 : i32
    %c0_i32_0 = arith.constant 0 : i32
    %c0_i32_1 = arith.constant 0 : i32
    %c0_i32_2 = arith.constant 0 : i32
    return %c0_i32, %c0_i32_0, %c0_i32_1 : i32, i32, i32
  }
  func.func @transform_7(%arg0: i32) -> (i32, i32, i32) {
    %c0_i32 = arith.constant 0 : i32
    %c0_i32_0 = arith.constant 0 : i32
    %c0_i32_1 = arith.constant 0 : i32
    %c0_i32_2 = arith.constant 0 : i32
    return %c0_i32, %c0_i32_0, %c0_i32_1 : i32, i32, i32
  }
  func.func @transform_8(%arg0: i32) -> (i32, i32) {
    %c0_i32 = arith.constant 0 : i32
    %c0_i32_0 = arith.constant 0 : i32
    %c0_i32_1 = arith.constant 0 : i32
    return %c0_i32, %c0_i32_0 : i32, i32
  }
  func.func @transform_9(%arg0: i32) -> (i32, i32) {
    %c0_i32 = arith.constant 0 : i32
    %c0_i32_0 = arith.constant 0 : i32
    %c0_i32_1 = arith.constant 0 : i32
    return %c0_i32, %c0_i32_0 : i32, i32
  }
}

</mosaic_0001>

<llo_original>
// kernel: tile.44
$region0: #{tile.44}
  #allocation0 [shape = 's32[1]{0}', space=sflag, size = 0x4, scoped, tag = 'scoped memory for tile.44']
  %s0 = inlined_call_operand.vmem [shape: f32[4], index: 0, kind: input, shape index: {}]
  %s1 = inlined_call_operand.vmem [shape: f32[16,4], index: 1, kind: output, shape index: {}]
  // Predicated region
  $region2: #{tile.44} parent=0 // pred_check
    _
  $region3: #{tile.44} parent=0 // pred_check_branch
    %3 = sbr.rel (0) target = $region5
  $region4: #{tile.44} parent=0 // pred_region
    _
  $region5: #{tile.44} parent=0 // pred_fallthru
    _
  %v4 = vld [vmem:[%s0] ss:$0 sm:$0xff]
  %5 = vst [vmem:[%s1] sm:$0xff] %v4
  %s6 = scalar_lea.vmem %s1, 8
  %7 = vst [vmem:[%s6] sm:$0xff] %v4

// kernel: tile.49
$region0: #{tile.49}
  %s0 = inlined_call_operand.vmem [shape: f32[16,4], index: 0, kind: input, shape index: {}]
  %s1 = inlined_call_operand.vmem [shape: f32[1,64], index: 1, kind: output, shape index: {}]
  $region1: #{tile.49} parent=0
    #allocation0 [shape = 'u8[4096]{0}', space=vmem, size = 0x1000, scoped, tag = 'scoped mem for output reshape']
    %v2 = vld [vmem:[%s0] sm:$0x1]
    %vm3 = vcmask 31744
    %4 = vst.msk [vmem:[#allocation0] sm:$0x1] %vm3, %v2
    %s5 = scalar_lea.vmem %s0, 15
    %v6 = vld [vmem:[%s5] sm:$0x1]
    %7 = vrot.lane.b32.xlu0 %v6, 60
    %v8 = vpop.permute.xlu0 %7
    %vm9 = vcmask 523744
    %10 = vst.msk [vmem:[#allocation0] sm:$0x1] %vm9, %v8
    %s11 = scalar_lea.vmem %s0, 14
    %v12 = vld [vmem:[%s11] sm:$0x1]
    %13 = vrot.lane.b32.xlu0 %v12, 56
    %v14 = vpop.permute.xlu0 %13
    %vm15 = vcmask 490944
    %16 = vst.msk [vmem:[#allocation0] sm:$0x1] %vm15, %v14
    %s17 = scalar_lea.vmem %s0, 13
    %v18 = vld [vmem:[%s17] sm:$0x1]
    %19 = vrot.lane.b32.xlu0 %v18, 52
    %v20 = vpop.permute.xlu0 %19
    %vm21 = vcmask 458144
    %22 = vst.msk [vmem:[#allocation0] sm:$0x1] %vm21, %v20
    %s23 = scalar_lea.vmem %s0, 12
    %v24 = vld [vmem:[%s23] sm:$0x1]
    %25 = vrot.lane.b32.xlu0 %v24, 48
    %v26 = vpop.permute.xlu0 %25
    %vm27 = vcmask 425344
    %28 = vst.msk [vmem:[#allocation0] sm:$0x1] %vm27, %v26
    %s29 = scalar_lea.vmem %s0, 11
    %v30 = vld [vmem:[%s29] sm:$0x1]
    %31 = vrot.lane.b32.xlu0 %v30, 44
    %v32 = vpop.permute.xlu0 %31
    %vm33 = vcmask 392544
    %34 = vst.msk [vmem:[#allocation0] sm:$0x1] %vm33, %v32
    %s35 = scalar_lea.vmem %s0, 10
    %v36 = vld [vmem:[%s35] sm:$0x1]
    %37 = vrot.lane.b32.xlu0 %v36, 40
    %v38 = vpop.permute.xlu0 %37
    %vm39 = vcmask 359744
    %40 = vst.msk [vmem:[#allocation0] sm:$0x1] %vm39, %v38
    %s41 = scalar_lea.vmem %s0, 9
    %v42 = vld [vmem:[%s41] sm:$0x1]
    %43 = vrot.lane.b32.xlu0 %v42, 36
    %v44 = vpop.permute.xlu0 %43
    %vm45 = vcmask 326944
    %46 = vst.msk [vmem:[#allocation0] sm:$0x1] %vm45, %v44
    %s47 = scalar_lea.vmem %s0, 8
    %v48 = vld [vmem:[%s47] sm:$0x1]
    %49 = vrot.lane.b32.xlu0 %v48, 32
    %v50 = vpop.permute.xlu0 %49
    %vm51 = vcmask 294144
    %52 = vst.msk [vmem:[#allocation0] sm:$0x1] %vm51, %v50
    %s53 = scalar_lea.vmem %s0, 7
    %v54 = vld [vmem:[%s53] sm:$0x1]
    %55 = vrot.lane.b32.xlu0 %v54, 28
    %v56 = vpop.permute.xlu0 %55
    %vm57 = vcmask 261344
    %58 = vst.msk [vmem:[#allocation0] sm:$0x1] %vm57, %v56
    %s59 = scalar_lea.vmem %s0, 6
    %v60 = vld [vmem:[%s59] sm:$0x1]
    %61 = vrot.lane.b32.xlu0 %v60, 24
    %v62 = vpop.permute.xlu0 %61
    %vm63 = vcmask 228544
    %64 = vst.msk [vmem:[#allocation0] sm:$0x1] %vm63, %v62
    %s65 = scalar_lea.vmem %s0, 5
    %v66 = vld [vmem:[%s65] sm:$0x1]
    %67 = vrot.lane.b32.xlu0 %v66, 20
    %v68 = vpop.permute.xlu0 %67
    %vm69 = vcmask 195744
    %70 = vst.msk [vmem:[#allocation0] sm:$0x1] %vm69, %v68
    %s71 = scalar_lea.vmem %s0, 4
    %v72 = vld [vmem:[%s71] sm:$0x1]
    %73 = vrot.lane.b32.xlu0 %v72, 16
    %v74 = vpop.permute.xlu0 %73
    %vm75 = vcmask 162944
    %76 = vst.msk [vmem:[#allocation0] sm:$0x1] %vm75, %v74
    %s77 = scalar_lea.vmem %s0, 3
    %v78 = vld [vmem:[%s77] sm:$0x1]
    %79 = vrot.lane.b32.xlu0 %v78, 12
    %v80 = vpop.permute.xlu0 %79
    %vm81 = vcmask 130144
    %82 = vst.msk [vmem:[#allocation0] sm:$0x1] %vm81, %v80
    %s83 = scalar_lea.vmem %s0, 2
    %v84 = vld [vmem:[%s83] sm:$0x1]
    %85 = vrot.lane.b32.xlu0 %v84, 8
    %v86 = vpop.permute.xlu0 %85
    %vm87 = vcmask 97344
    %88 = vst.msk [vmem:[#allocation0] sm:$0x1] %vm87, %v86
    %s89 = scalar_lea.vmem %s0, 1
    %v90 = vld [vmem:[%s89] sm:$0x1]
    %91 = vrot.lane.b32.xlu0 %v90, 4
    %v92 = vpop.permute.xlu0 %91
    %vm93 = vcmask 64544
    %94 = vst.msk [vmem:[#allocation0] sm:$0x1] %vm93, %v92
    %s96 = sshll.u32 1, 1
    %s97 = ssub.s32 %s96, 1
    %v99 = vld [vmem:[#allocation0] sm:%s97]
    %s100 = sshll.u32 1, 1
    %s101 = ssub.s32 %s100, 1
    %102 = vst [vmem:[%s1] sm:%s101] %v99

// kernel: decoder_forward.1
$region0: #{decoder_forward.1}
  #allocation0 [shape = 'u32[]', space=smem, size = 0x4, offset = 0x4, fixed_abs, tag = 'smem constant byte address 0x4 - core index']
  #allocation1 [shape = 'u32[144,128]{1,0:T(1,128)}', space=vmem, size = 0x12000, scoped, tag = 'internal scratch']
  %s0 = inlined_call_operand.vmem [shape: f32[16,64], index: 0, kind: input, shape index: {}]
  %s1 = inlined_call_operand.vmem [shape: f32[32,64], index: 1, kind: input, shape index: {}]
  %s2 = inlined_call_operand.vmem [shape: f32[2,32,16], index: 2, kind: input, shape index: {}]
  %s3 = inlined_call_operand.vmem [shape: f32[2,64,64], index: 3, kind: input, shape index: {}]
  %s4 = inlined_call_operand.vmem [shape: f32[2,32,32], index: 4, kind: input, shape index: {}]
  %s5 = inlined_call_operand.vmem [shape: f32[3,64,64], index: 5, kind: input, shape index: {}]
  %s6 = inlined_call_operand.vmem [shape: f32[3,64,64], index: 6, kind: input, shape index: {}]
  %s7 = inlined_call_operand.vmem [shape: f32[3,64,64], index: 7, kind: input, shape index: {}]
  %s8 = inlined_call_operand.vmem [shape: f32[5,64], index: 8, kind: input, shape index: {}]
  %s9 = inlined_call_operand.vmem [shape: f32[32,64], index: 9, kind: output, shape index: {}]
  %s10 = sld [smem:[#allocation0]]
  $region46: #{decoder_forward.1} parent=0
    _
  %s12 = ssub.s32 1, %s10
  %s13 = scalar_select 0, %s12, %s10
  // Predicated region
  $region2: #{decoder_forward.1} parent=0 // pred_check
    _
  $region3: #{decoder_forward.1} parent=0 // pred_check_branch
    %15 = sbr.rel (0) target = $region5
  $region4: #{decoder_forward.1} parent=0 // pred_region
    _
  $region5: #{decoder_forward.1} parent=0 // pred_fallthru
    _
  // Predicated region
  $region6: #{decoder_forward.1} parent=0 // pred_check
    _
  $region7: #{decoder_forward.1} parent=0 // pred_check_branch
    %17 = sbr.rel (0) target = $region9
  $region8: #{decoder_forward.1} parent=0 // pred_region
    _
  $region9: #{decoder_forward.1} parent=0 // pred_fallthru
    _
  // Predicated region
  $region10: #{decoder_forward.1} parent=0 // pred_check
    _
  $region11: #{decoder_forward.1} parent=0 // pred_check_branch
    %19 = sbr.rel (0) target = $region13
  $region12: #{decoder_forward.1} parent=0 // pred_region
    _
  $region13: #{decoder_forward.1} parent=0 // pred_fallthru
    _
  // Predicated region
  $region14: #{decoder_forward.1} parent=0 // pred_check
    _
  $region15: #{decoder_forward.1} parent=0 // pred_check_branch
    %21 = sbr.rel (0) target = $region17
  $region16: #{decoder_forward.1} parent=0 // pred_region
    _
  $region17: #{decoder_forward.1} parent=0 // pred_fallthru
    _
  // Predicated region
  $region18: #{decoder_forward.1} parent=0 // pred_check
    _
  $region19: #{decoder_forward.1} parent=0 // pred_check_branch
    %23 = sbr.rel (0) target = $region21
  $region20: #{decoder_forward.1} parent=0 // pred_region
    _
  $region21: #{decoder_forward.1} parent=0 // pred_fallthru
    _
  // Predicated region
  $region22: #{decoder_forward.1} parent=0 // pred_check
    _
  $region23: #{decoder_forward.1} parent=0 // pred_check_branch
    %25 = sbr.rel (0) target = $region25
  $region24: #{decoder_forward.1} parent=0 // pred_region
    _
  $region25: #{decoder_forward.1} parent=0 // pred_fallthru
    _
  // Predicated region
  $region26: #{decoder_forward.1} parent=0 // pred_check
    _
  $region27: #{decoder_forward.1} parent=0 // pred_check_branch
    %27 = sbr.rel (0) target = $region29
  $region28: #{decoder_forward.1} parent=0 // pred_region
    _
  $region29: #{decoder_forward.1} parent=0 // pred_fallthru
    _
  // Predicated region
  $region30: #{decoder_forward.1} parent=0 // pred_check
    _
  $region31: #{decoder_forward.1} parent=0 // pred_check_branch
    %29 = sbr.rel (0) target = $region33
  $region32: #{decoder_forward.1} parent=0 // pred_region
    _
  $region33: #{decoder_forward.1} parent=0 // pred_fallthru
    _
  // Predicated region
  $region34: #{decoder_forward.1} parent=0 // pred_check
    _
  $region35: #{decoder_forward.1} parent=0 // pred_check_branch
    %31 = sbr.rel (0) target = $region37
  $region36: #{decoder_forward.1} parent=0 // pred_region
    _
  $region37: #{decoder_forward.1} parent=0 // pred_fallthru
    _
  %v32 = vld [vmem:[%s0] sm:$0xff]
  %v33 = vld [vmem:[%s0 + $0x8] sm:$0xff]
  %v34 = vld [vmem:[%s1] sm:$0xff]
  %v35 = vld [vmem:[%s1 + $0x8] sm:$0xff]
  %v36 = vld [vmem:[%s1 + $0x10] sm:$0xff]
  %v37 = vld [vmem:[%s1 + $0x18] sm:$0xff]
  %v38 = vld [vmem:[%s8] sm:$0x1f]
  %v39 = vld [vmem:[%s2] sm:$0xff]
  %v40 = vld [vmem:[%s2 + $0x8] sm:$0xff]
  %v41 = vld [vmem:[%s2 + $0x10] sm:$0xff]
  %v42 = vld [vmem:[%s2 + $0x18] sm:$0xff]
  %v43 = vld [vmem:[%s3] sm:$0xff]
  %v44 = vld [vmem:[%s3 + $0x8] sm:$0xff]
  %v45 = vld [vmem:[%s3 + $0x10] sm:$0xff]
  %v46 = vld [vmem:[%s3 + $0x18] sm:$0xff]
  %v47 = vld [vmem:[%s3 + $0x20] sm:$0xff]
  %v48 = vld [vmem:[%s3 + $0x28] sm:$0xff]
  %v49 = vld [vmem:[%s3 + $0x30] sm:$0xff]
  %v50 = vld [vmem:[%s3 + $0x38] sm:$0xff]
  %vm51 = vcmask 523264
  %v53 = vsel %vm51, %v32, 0
  %v56 = vsel %vm51, %v33, 0
  %58 = vmatprep.subr.mxu0 0.0
  %59 = vmatpush1.msra.mxu0 0.0
  %60 = vmatprep.subr.mxu0 0.0
  %61 = vmatpush1.msra.mxu0 0.0
  %62 = vmatprep.subr.mxu0 0.0
  %63 = vmatpush1.msra.mxu0 0.0
  %64 = vmatprep.subr.mxu0 0.0
  %65 = vmatpush1.msra.mxu0 0.0
  %66 = vmatprep.subr.mxu0 0.0
  %67 = vmatpush1.msra.mxu0 0.0
  %68 = vmatprep.subr.mxu0 0.0
  %69 = vmatpush1.msra.mxu0 0.0
  %70 = vmatprep.subr.mxu0 0.0
  %71 = vmatpush1.msra.mxu0 0.0
  %72 = vmatprep.subr.mxu0 0.0
  %73 = vmatpush1.msra.mxu0 0.0
  %74 = vmatprep.subr.mxu0 0.0
  %75 = vmatpush1.msra.mxu0 %v50
  %76 = vmatprep.subr.mxu0 0.0
  %77 = vmatpush1.msra.mxu0 %v49
  %78 = vmatprep.subr.mxu0 0.0
  %79 = vmatpush1.msra.mxu0 %v48
  %80 = vmatprep.subr.mxu0 0.0
  %81 = vmatpush1.msra.mxu0 %v47
  %82 = vmatprep.subr.mxu0 0.0
  %83 = vmatpush1.msra.mxu0 %v46
  %84 = vmatprep.subr.mxu0 0.0
  %85 = vmatpush1.msra.mxu0 %v45
  %86 = vmatprep.subr.mxu0 0.0
  %87 = vmatpush1.msra.mxu0 %v44
  %88 = vmatprep.subr.mxu0 0.0
  %89 = vmatpush1.msra.mxu0 %v43
  %90 = vmatprep.subr.mxu0 0.0
  %91 = vmatpush2.msra.mxu0 0.0
  %92 = vmatprep.subr.mxu0 0.0
  %93 = vmatpush2.msra.mxu0 0.0
  %94 = vmatprep.subr.mxu0 0.0
  %95 = vmatpush2.msra.mxu0 0.0
  %96 = vmatprep.subr.mxu0 0.0
  %97 = vmatpush2.msra.mxu0 0.0
  %98 = vmatprep.subr.mxu0 0.0
  %99 = vmatpush2.msra.mxu0 0.0
  %100 = vmatprep.subr.mxu0 0.0
  %101 = vmatpush2.msra.mxu0 0.0
  %102 = vmatprep.subr.mxu0 0.0
  %103 = vmatpush2.msra.mxu0 0.0
  %104 = vmatprep.subr.mxu0 0.0
  %105 = vmatpush2.msra.mxu0 0.0
  %106 = vmatprep.subr.mxu0 0.0
  %107 = vmatpush2.msra.mxu0 0.0
  %108 = vmatprep.subr.mxu0 0.0
  %109 = vmatpush2.msra.mxu0 0.0
  %110 = vmatprep.subr.mxu0 0.0
  %111 = vmatpush2.msra.mxu0 0.0
  %112 = vmatprep.subr.mxu0 0.0
  %113 = vmatpush2.msra.mxu0 0.0
  %114 = vmatprep.subr.mxu0 0.0
  %115 = vmatpush2.msra.mxu0 0.0
  %116 = vmatprep.subr.mxu0 0.0
  %117 = vmatpush2.msra.mxu0 0.0
  %118 = vmatprep.subr.mxu0 0.0
  %119 = vmatpush2.msra.mxu0 0.0
  %120 = vmatprep.subr.mxu0 0.0
  %121 = vmatpush2.msra.mxu0 0.0
  %122 = vmatprep.mubr.f32.mxu0 0.0
  %123 = vmatmul.mubr.f32.gmra.mxu0 %v53
  %v124 = vpop.f32.mrf.mxu0
  %v125 = vadd.f32 0.0, %v124
  %v126 = vpop.f32.mrf.mxu0
  %127 = vmatprep.mubr.f32.mxu0 0.0
  %128 = vmatmul.mubr.f32.gmra.mxu0 %v56
  %v129 = vpop.f32.mrf.mxu0
  %v130 = vadd.f32 0.0, %v129
  %v131 = vpop.f32.mrf.mxu0
  %132 = vdwg.mxu0
  %s133 = scalar_lea.vmem %s2, 32
  %v134 = vld [vmem:[%s133] sm:$0xff]
  %v135 = vld [vmem:[%s133 + $0x8] sm:$0xff]
  %v136 = vld [vmem:[%s133 + $0x10] sm:$0xff]
  %v137 = vld [vmem:[%s133 + $0x18] sm:$0xff]
  %s138 = scalar_lea.vmem %s3, 64
  %v139 = vld [vmem:[%s138] sm:$0xff]
  %v140 = vld [vmem:[%s138 + $0x8] sm:$0xff]
  %v141 = vld [vmem:[%s138 + $0x10] sm:$0xff]
  %v142 = vld [vmem:[%s138 + $0x18] sm:$0xff]
  %v143 = vld [vmem:[%s138 + $0x20] sm:$0xff]
  %v144 = vld [vmem:[%s138 + $0x28] sm:$0xff]
  %v145 = vld [vmem:[%s138 + $0x30] sm:$0xff]
  %v146 = vld [vmem:[%s138 + $0x38] sm:$0xff]
  %147 = vmatprep.subr.mxu0 0.0
  %148 = vmatpush1.msra.mxu0 0.0
  %149 = vmatprep.subr.mxu0 0.0
  %150 = vmatpush1.msra.mxu0 0.0
  %151 = vmatprep.subr.mxu0 0.0
  %152 = vmatpush1.msra.mxu0 0.0
  %153 = vmatprep.subr.mxu0 0.0
  %154 = vmatpush1.msra.mxu0 0.0
  %155 = vmatprep.subr.mxu0 0.0
  %156 = vmatpush1.msra.mxu0 0.0
  %157 = vmatprep.subr.mxu0 0.0
  %158 = vmatpush1.msra.mxu0 0.0
  %159 = vmatprep.subr.mxu0 0.0
  %160 = vmatpush1.msra.mxu0 0.0
  %161 = vmatprep.subr.mxu0 0.0
  %162 = vmatpush1.msra.mxu0 0.0
  %163 = vmatprep.subr.mxu0 0.0
  %164 = vmatpush1.msra.mxu0 %v146
  %165 = vmatprep.subr.mxu0 0.0
  %166 = vmatpush1.msra.mxu0 %v145
  %167 = vmatprep.subr.mxu0 0.0
  %168 = vmatpush1.msra.mxu0 %v144
  %169 = vmatprep.subr.mxu0 0.0
  %170 = vmatpush1.msra.mxu0 %v143
  %171 = vmatprep.subr.mxu0 0.0
  %172 = vmatpush1.msra.mxu0 %v142
  %173 = vmatprep.subr.mxu0 0.0
  %174 = vmatpush1.msra.mxu0 %v141
  %175 = vmatprep.subr.mxu0 0.0
  %176 = vmatpush1.msra.mxu0 %v140
  %177 = vmatprep.subr.mxu0 0.0
  %178 = vmatpush1.msra.mxu0 %v139
  %179 = vmatprep.subr.mxu0 0.0
  %180 = vmatpush2.msra.mxu0 0.0
  %181 = vmatprep.subr.mxu0 0.0
  %182 = vmatpush2.msra.mxu0 0.0
  %183 = vmatprep.subr.mxu0 0.0
  %184 = vmatpush2.msra.mxu0 0.0
  %185 = vmatprep.subr.mxu0 0.0
  %186 = vmatpush2.msra.mxu0 0.0
  %187 = vmatprep.subr.mxu0 0.0
  %188 = vmatpush2.msra.mxu0 0.0
  %189 = vmatprep.subr.mxu0 0.0
  %190 = vmatpush2.msra.mxu0 0.0
  %191 = vmatprep.subr.mxu0 0.0
  %192 = vmatpush2.msra.mxu0 0.0
  %193 = vmatprep.subr.mxu0 0.0
  %194 = vmatpush2.msra.mxu0 0.0
  %195 = vmatprep.subr.mxu0 0.0
  %196 = vmatpush2.msra.mxu0 0.0
  %197 = vmatprep.subr.mxu0 0.0
  %198 = vmatpush2.msra.mxu0 0.0
  %199 = vmatprep.subr.mxu0 0.0
  %200 = vmatpush2.msra.mxu0 0.0
  %201 = vmatprep.subr.mxu0 0.0
  %202 = vmatpush2.msra.mxu0 0.0
  %203 = vmatprep.subr.mxu0 0.0
  %204 = vmatpush2.msra.mxu0 0.0
  %205 = vmatprep.subr.mxu0 0.0
  %206 = vmatpush2.msra.mxu0 0.0
  %207 = vmatprep.subr.mxu0 0.0
  %208 = vmatpush2.msra.mxu0 0.0
  %209 = vmatprep.subr.mxu0 0.0
  %210 = vmatpush2.msra.mxu0 0.0
  %211 = vmatprep.mubr.f32.mxu0 0.0
  %212 = vmatmul.mubr.f32.gmra.mxu0 %v53
  %v213 = vpop.f32.mrf.mxu0
  %v214 = vadd.f32 0.0, %v213
  %v215 = vpop.f32.mrf.mxu0
  %216 = vmatprep.mubr.f32.mxu0 0.0
  %217 = vmatmul.mubr.f32.gmra.mxu0 %v56
  %v218 = vpop.f32.mrf.mxu0
  %v219 = vadd.f32 0.0, %v218
  %v220 = vpop.f32.mrf.mxu0
  %221 = vdwg.mxu0
  %vm222 = vcmask 130048
  %v224 = vsel %vm222, %v134, 0
  %v227 = vsel %vm222, %v135, 0
  %v230 = vsel %vm222, %v136, 0
  %v233 = vsel %vm222, %v137, 0
  %235 = vmatprep.subr.mxu0 0.0
  %236 = vmatpush1.msra.mxu0 0.0
  %237 = vmatprep.subr.mxu0 0.0
  %238 = vmatpush1.msra.mxu0 0.0
  %239 = vmatprep.subr.mxu0 0.0
  %240 = vmatpush1.msra.mxu0 0.0
  %241 = vmatprep.subr.mxu0 0.0
  %242 = vmatpush1.msra.mxu0 0.0
  %243 = vmatprep.subr.mxu0 0.0
  %244 = vmatpush1.msra.mxu0 0.0
  %245 = vmatprep.subr.mxu0 0.0
  %246 = vmatpush1.msra.mxu0 0.0
  %247 = vmatprep.subr.mxu0 0.0
  %248 = vmatpush1.msra.mxu0 0.0
  %249 = vmatprep.subr.mxu0 0.0
  %250 = vmatpush1.msra.mxu0 0.0
  %251 = vmatprep.subr.mxu0 0.0
  %252 = vmatpush1.msra.mxu0 0.0
  %253 = vmatprep.subr.mxu0 0.0
  %254 = vmatpush1.msra.mxu0 0.0
  %255 = vmatprep.subr.mxu0 0.0
  %256 = vmatpush1.msra.mxu0 0.0
  %257 = vmatprep.subr.mxu0 0.0
  %258 = vmatpush1.msra.mxu0 0.0
  %259 = vmatprep.subr.mxu0 0.0
  %260 = vmatpush1.msra.mxu0 0.0
  %261 = vmatprep.subr.mxu0 0.0
  %262 = vmatpush1.msra.mxu0 0.0
  %263 = vmatprep.subr.mxu0 0.0
  %264 = vmatpush1.msra.mxu0 %v219
  %265 = vmatprep.subr.mxu0 0.0
  %266 = vmatpush1.msra.mxu0 %v214
  %267 = vmatprep.subr.mxu0 0.0
  %268 = vmatpush2.msra.mxu0 0.0
  %269 = vmatprep.subr.mxu0 0.0
  %270 = vmatpush2.msra.mxu0 0.0
  %271 = vmatprep.subr.mxu0 0.0
  %272 = vmatpush2.msra.mxu0 0.0
  %273 = vmatprep.subr.mxu0 0.0
  %274 = vmatpush2.msra.mxu0 0.0
  %275 = vmatprep.subr.mxu0 0.0
  %276 = vmatpush2.msra.mxu0 0.0
  %277 = vmatprep.subr.mxu0 0.0
  %278 = vmatpush2.msra.mxu0 0.0
  %279 = vmatprep.subr.mxu0 0.0
  %280 = vmatpush2.msra.mxu0 0.0
  %281 = vmatprep.subr.mxu0 0.0
  %282 = vmatpush2.msra.mxu0 0.0
  %283 = vmatprep.subr.mxu0 0.0
  %284 = vmatpush2.msra.mxu0 0.0
  %285 = vmatprep.subr.mxu0 0.0
  %286 = vmatpush2.msra.mxu0 0.0
  %287 = vmatprep.subr.mxu0 0.0
  %288 = vmatpush2.msra.mxu0 0.0
  %289 = vmatprep.subr.mxu0 0.0
  %290 = vmatpush2.msra.mxu0 0.0
  %291 = vmatprep.subr.mxu0 0.0
  %292 = vmatpush2.msra.mxu0 0.0
  %293 = vmatprep.subr.mxu0 0.0
  %294 = vmatpush2.msra.mxu0 0.0
  %295 = vmatprep.subr.mxu0 0.0
  %296 = vmatpush2.msra.mxu0 0.0
  %297 = vmatprep.subr.mxu0 0.0
  %298 = vmatpush2.msra.mxu0 0.0
  %299 = vmatprep.mubr.f32.mxu0 0.0
  %300 = vmatmul.mubr.f32.gmra.mxu0 %v224
  %v301 = vpop.f32.mrf.mxu0
  %v302 = vadd.f32 0.0, %v301
  %v303 = vpop.f32.mrf.mxu0
  %304 = vmatprep.mubr.f32.mxu0 0.0
  %305 = vmatmul.mubr.f32.gmra.mxu0 %v227
  %v306 = vpop.f32.mrf.mxu0
  %v307 = vadd.f32 0.0, %v306
  %v308 = vpop.f32.mrf.mxu0
  %309 = vmatprep.mubr.f32.mxu0 0.0
  %310 = vmatmul.mubr.f32.gmra.mxu0 %v230
  %v311 = vpop.f32.mrf.mxu0
  %v312 = vadd.f32 0.0, %v311
  %v313 = vpop.f32.mrf.mxu0
  %314 = vmatprep.mubr.f32.mxu0 0.0
  %315 = vmatmul.mubr.f32.gmra.mxu0 %v233
  %v316 = vpop.f32.mrf.mxu0
  %v317 = vadd.f32 0.0, %v316
  %v318 = vpop.f32.mrf.mxu0
  %319 = vdwg.mxu0
  %v321 = vsel %vm222, %v39, 0
  %v324 = vsel %vm222, %v40, 0
  %v327 = vsel %vm222, %v41, 0
  %v330 = vsel %vm222, %v42, 0
  %332 = vmatprep.subr.mxu0 0.0
  %333 = vmatpush1.msra.mxu0 0.0
  %334 = vmatprep.subr.mxu0 0.0
  %335 = vmatpush1.msra.mxu0 0.0
  %336 = vmatprep.subr.mxu0 0.0
  %337 = vmatpush1.msra.mxu0 0.0
  %338 = vmatprep.subr.mxu0 0.0
  %339 = vmatpush1.msra.mxu0 0.0
  %340 = vmatprep.subr.mxu0 0.0
  %341 = vmatpush1.msra.mxu0 0.0
  %342 = vmatprep.subr.mxu0 0.0
  %343 = vmatpush1.msra.mxu0 0.0
  %344 = vmatprep.subr.mxu0 0.0
  %345 = vmatpush1.msra.mxu0 0.0
  %346 = vmatprep.subr.mxu0 0.0
  %347 = vmatpush1.msra.mxu0 0.0
  %348 = vmatprep.subr.mxu0 0.0
  %349 = vmatpush1.msra.mxu0 0.0
  %350 = vmatprep.subr.mxu0 0.0
  %351 = vmatpush1.msra.mxu0 0.0
  %352 = vmatprep.subr.mxu0 0.0
  %353 = vmatpush1.msra.mxu0 0.0
  %354 = vmatprep.subr.mxu0 0.0
  %355 = vmatpush1.msra.mxu0 0.0
  %356 = vmatprep.subr.mxu0 0.0
  %357 = vmatpush1.msra.mxu0 0.0
  %358 = vmatprep.subr.mxu0 0.0
  %359 = vmatpush1.msra.mxu0 0.0
  %360 = vmatprep.subr.mxu0 0.0
  %361 = vmatpush1.msra.mxu0 %v130
  %362 = vmatprep.subr.mxu0 0.0
  %363 = vmatpush1.msra.mxu0 %v125
  %364 = vmatprep.subr.mxu0 0.0
  %365 = vmatpush2.msra.mxu0 0.0
  %366 = vmatprep.subr.mxu0 0.0
  %367 = vmatpush2.msra.mxu0 0.0
  %368 = vmatprep.subr.mxu0 0.0
  %369 = vmatpush2.msra.mxu0 0.0
  %370 = vmatprep.subr.mxu0 0.0
  %371 = vmatpush2.msra.mxu0 0.0
  %372 = vmatprep.subr.mxu0 0.0
  %373 = vmatpush2.msra.mxu0 0.0
  %374 = vmatprep.subr.mxu0 0.0
  %375 = vmatpush2.msra.mxu0 0.0
  %376 = vmatprep.subr.mxu0 0.0
  %377 = vmatpush2.msra.mxu0 0.0
  %378 = vmatprep.subr.mxu0 0.0
  %379 = vmatpush2.msra.mxu0 0.0
  %380 = vmatprep.subr.mxu0 0.0
  %381 = vmatpush2.msra.mxu0 0.0
  %382 = vmatprep.subr.mxu0 0.0
  %383 = vmatpush2.msra.mxu0 0.0
  %384 = vmatprep.subr.mxu0 0.0
  %385 = vmatpush2.msra.mxu0 0.0
  %386 = vmatprep.subr.mxu0 0.0
  %387 = vmatpush2.msra.mxu0 0.0
  %388 = vmatprep.subr.mxu0 0.0
  %389 = vmatpush2.msra.mxu0 0.0
  %390 = vmatprep.subr.mxu0 0.0
  %391 = vmatpush2.msra.mxu0 0.0
  %392 = vmatprep.subr.mxu0 0.0
  %393 = vmatpush2.msra.mxu0 0.0
  %394 = vmatprep.subr.mxu0 0.0
  %395 = vmatpush2.msra.mxu0 0.0
  %396 = vmatprep.mubr.f32.mxu0 0.0
  %397 = vmatmul.mubr.f32.gmra.mxu0 %v321
  %v398 = vpop.f32.mrf.mxu0
  %v399 = vadd.f32 %v302, %v398
  %v400 = vpop.f32.mrf.mxu0
  %401 = vmatprep.mubr.f32.mxu0 0.0
  %402 = vmatmul.mubr.f32.gmra.mxu0 %v324
  %v403 = vpop.f32.mrf.mxu0
  %v404 = vadd.f32 %v307, %v403
  %v405 = vpop.f32.mrf.mxu0
  %406 = vmatprep.mubr.f32.mxu0 0.0
  %407 = vmatmul.mubr.f32.gmra.mxu0 %v327
  %v408 = vpop.f32.mrf.mxu0
  %v409 = vadd.f32 %v312, %v408
  %v410 = vpop.f32.mrf.mxu0
  %411 = vmatprep.mubr.f32.mxu0 0.0
  %412 = vmatmul.mubr.f32.gmra.mxu0 %v330
  %v413 = vpop.f32.mrf.mxu0
  %v414 = vadd.f32 %v317, %v413
  %v415 = vpop.f32.mrf.mxu0
  %416 = vdwg.mxu0
  %v417 = vlaneseq
  %v418 = vshrl.u32 %v417, 7
  %v419 = vsub.s32 0, %v418
  %v420 = vrot.slane %v38, %v419
  %v421 = vadd.f32 %v399, %v420
  %v422 = vadd.f32 %v404, %v420
  %v423 = vadd.f32 %v409, %v420
  %v424 = vadd.f32 %v414, %v420
  %v425 = vld [vmem:[%s4] sm:$0xff]
  %v426 = vld [vmem:[%s4 + $0x8] sm:$0xff]
  %v427 = vld [vmem:[%s4 + $0x10] sm:$0xff]
  %v428 = vld [vmem:[%s4 + $0x18] sm:$0xff]
  %v429 = vld [vmem:[%s5] sm:$0xff]
  %v430 = vld [vmem:[%s5 + $0x8] sm:$0xff]
  %v431 = vld [vmem:[%s5 + $0x10] sm:$0xff]
  %v432 = vld [vmem:[%s5 + $0x18] sm:$0xff]
  %v433 = vld [vmem:[%s5 + $0x20] sm:$0xff]
  %v434 = vld [vmem:[%s5 + $0x28] sm:$0xff]
  %v435 = vld [vmem:[%s5 + $0x30] sm:$0xff]
  %v436 = vld [vmem:[%s5 + $0x38] sm:$0xff]
  %v437 = vld [vmem:[%s6] sm:$0xff]
  %v438 = vld [vmem:[%s6 + $0x8] sm:$0xff]
  %v439 = vld [vmem:[%s6 + $0x10] sm:$0xff]
  %v440 = vld [vmem:[%s6 + $0x18] sm:$0xff]
  %v441 = vld [vmem:[%s6 + $0x20] sm:$0xff]
  %v442 = vld [vmem:[%s6 + $0x28] sm:$0xff]
  %v443 = vld [vmem:[%s6 + $0x30] sm:$0xff]
  %v444 = vld [vmem:[%s6 + $0x38] sm:$0xff]
  %v446 = vsel %vm51, %v421, 0
  %v449 = vsel %vm51, %v422, 0
  %v452 = vsel %vm51, %v423, 0
  %v455 = vsel %vm51, %v424, 0
  %457 = vmatprep.subr.mxu0 0.0
  %458 = vmatpush1.msra.mxu0 0.0
  %459 = vmatprep.subr.mxu0 0.0
  %460 = vmatpush1.msra.mxu0 0.0
  %461 = vmatprep.subr.mxu0 0.0
  %462 = vmatpush1.msra.mxu0 0.0
  %463 = vmatprep.subr.mxu0 0.0
  %464 = vmatpush1.msra.mxu0 0.0
  %465 = vmatprep.subr.mxu0 0.0
  %466 = vmatpush1.msra.mxu0 0.0
  %467 = vmatprep.subr.mxu0 0.0
  %468 = vmatpush1.msra.mxu0 0.0
  %469 = vmatprep.subr.mxu0 0.0
  %470 = vmatpush1.msra.mxu0 0.0
  %471 = vmatprep.subr.mxu0 0.0
  %472 = vmatpush1.msra.mxu0 0.0
  %473 = vmatprep.subr.mxu0 0.0
  %474 = vmatpush1.msra.mxu0 %v444
  %475 = vmatprep.subr.mxu0 0.0
  %476 = vmatpush1.msra.mxu0 %v443
  %477 = vmatprep.subr.mxu0 0.0
  %478 = vmatpush1.msra.mxu0 %v442
  %479 = vmatprep.subr.mxu0 0.0
  %480 = vmatpush1.msra.mxu0 %v441
  %481 = vmatprep.subr.mxu0 0.0
  %482 = vmatpush1.msra.mxu0 %v440
  %483 = vmatprep.subr.mxu0 0.0
  %484 = vmatpush1.msra.mxu0 %v439
  %485 = vmatprep.subr.mxu0 0.0
  %486 = vmatpush1.msra.mxu0 %v438
  %487 = vmatprep.subr.mxu0 0.0
  %488 = vmatpush1.msra.mxu0 %v437
  %489 = vmatprep.subr.mxu0 0.0
  %490 = vmatpush2.msra.mxu0 0.0
  %491 = vmatprep.subr.mxu0 0.0
  %492 = vmatpush2.msra.mxu0 0.0
  %493 = vmatprep.subr.mxu0 0.0
  %494 = vmatpush2.msra.mxu0 0.0
  %495 = vmatprep.subr.mxu0 0.0
  %496 = vmatpush2.msra.mxu0 0.0
  %497 = vmatprep.subr.mxu0 0.0
  %498 = vmatpush2.msra.mxu0 0.0
  %499 = vmatprep.subr.mxu0 0.0
  %500 = vmatpush2.msra.mxu0 0.0
  %501 = vmatprep.subr.mxu0 0.0
  %502 = vmatpush2.msra.mxu0 0.0
  %503 = vmatprep.subr.mxu0 0.0
  %504 = vmatpush2.msra.mxu0 0.0
  %505 = vmatprep.subr.mxu0 0.0
  %506 = vmatpush2.msra.mxu0 0.0
  %507 = vmatprep.subr.mxu0 0.0
  %508 = vmatpush2.msra.mxu0 0.0
  %509 = vmatprep.subr.mxu0 0.0
  %510 = vmatpush2.msra.mxu0 0.0
  %511 = vmatprep.subr.mxu0 0.0
  %512 = vmatpush2.msra.mxu0 0.0
  %513 = vmatprep.subr.mxu0 0.0
  %514 = vmatpush2.msra.mxu0 0.0
  %515 = vmatprep.subr.mxu0 0.0
  %516 = vmatpush2.msra.mxu0 0.0
  %517 = vmatprep.subr.mxu0 0.0
  %518 = vmatpush2.msra.mxu0 0.0
  %519 = vmatprep.subr.mxu0 0.0
  %520 = vmatpush2.msra.mxu0 0.0
  %521 = vmatprep.mubr.f32.mxu0 0.0
  %522 = vmatmul.mubr.f32.gmra.mxu0 %v446
  %v523 = vpop.f32.mrf.mxu0
  %v524 = vadd.f32 0.0, %v523
  %v525 = vpop.f32.mrf.mxu0
  %526 = vmatprep.mubr.f32.mxu0 0.0
  %527 = vmatmul.mubr.f32.gmra.mxu0 %v449
  %v528 = vpop.f32.mrf.mxu0
  %v529 = vadd.f32 0.0, %v528
  %v530 = vpop.f32.mrf.mxu0
  %531 = vmatprep.mubr.f32.mxu0 0.0
  %532 = vmatmul.mubr.f32.gmra.mxu0 %v452
  %v533 = vpop.f32.mrf.mxu0
  %v534 = vadd.f32 0.0, %v533
  %v535 = vpop.f32.mrf.mxu0
  %536 = vmatprep.mubr.f32.mxu0 0.0
  %537 = vmatmul.mubr.f32.gmra.mxu0 %v455
  %v538 = vpop.f32.mrf.mxu0
  %v539 = vadd.f32 0.0, %v538
  %v540 = vpop.f32.mrf.mxu0
  %541 = vdwg.mxu0
  %v543 = vsel %vm51, %v34, 0
  %v546 = vsel %vm51, %v35, 0
  %v549 = vsel %vm51, %v36, 0
  %v552 = vsel %vm51, %v37, 0
  %554 = vmatprep.subr.mxu0 0.0
  %555 = vmatpush1.msra.mxu0 0.0
  %556 = vmatprep.subr.mxu0 0.0
  %557 = vmatpush1.msra.mxu0 0.0
  %558 = vmatprep.subr.mxu0 0.0
  %559 = vmatpush1.msra.mxu0 0.0
  %560 = vmatprep.subr.mxu0 0.0
  %561 = vmatpush1.msra.mxu0 0.0
  %562 = vmatprep.subr.mxu0 0.0
  %563 = vmatpush1.msra.mxu0 0.0
  %564 = vmatprep.subr.mxu0 0.0
  %565 = vmatpush1.msra.mxu0 0.0
  %566 = vmatprep.subr.mxu0 0.0
  %567 = vmatpush1.msra.mxu0 0.0
  %568 = vmatprep.subr.mxu0 0.0
  %569 = vmatpush1.msra.mxu0 0.0
  %570 = vmatprep.subr.mxu0 0.0
  %571 = vmatpush1.msra.mxu0 %v436
  %572 = vmatprep.subr.mxu0 0.0
  %573 = vmatpush1.msra.mxu0 %v435
  %574 = vmatprep.subr.mxu0 0.0
  %575 = vmatpush1.msra.mxu0 %v434
  %576 = vmatprep.subr.mxu0 0.0
  %577 = vmatpush1.msra.mxu0 %v433
  %578 = vmatprep.subr.mxu0 0.0
  %579 = vmatpush1.msra.mxu0 %v432
  %580 = vmatprep.subr.mxu0 0.0
  %581 = vmatpush1.msra.mxu0 %v431
  %582 = vmatprep.subr.mxu0 0.0
  %583 = vmatpush1.msra.mxu0 %v430
  %584 = vmatprep.subr.mxu0 0.0
  %585 = vmatpush1.msra.mxu0 %v429
  %586 = vmatprep.subr.mxu0 0.0
  %587 = vmatpush2.msra.mxu0 0.0
  %588 = vmatprep.subr.mxu0 0.0
  %589 = vmatpush2.msra.mxu0 0.0
  %590 = vmatprep.subr.mxu0 0.0
  %591 = vmatpush2.msra.mxu0 0.0
  %592 = vmatprep.subr.mxu0 0.0
  %593 = vmatpush2.msra.mxu0 0.0
  %594 = vmatprep.subr.mxu0 0.0
  %595 = vmatpush2.msra.mxu0 0.0
  %596 = vmatprep.subr.mxu0 0.0
  %597 = vmatpush2.msra.mxu0 0.0
  %598 = vmatprep.subr.mxu0 0.0
  %599 = vmatpush2.msra.mxu0 0.0
  %600 = vmatprep.subr.mxu0 0.0
  %601 = vmatpush2.msra.mxu0 0.0
  %602 = vmatprep.subr.mxu0 0.0
  %603 = vmatpush2.msra.mxu0 0.0
  %604 = vmatprep.subr.mxu0 0.0
  %605 = vmatpush2.msra.mxu0 0.0
  %606 = vmatprep.subr.mxu0 0.0
  %607 = vmatpush2.msra.mxu0 0.0
  %608 = vmatprep.subr.mxu0 0.0
  %609 = vmatpush2.msra.mxu0 0.0
  %610 = vmatprep.subr.mxu0 0.0
  %611 = vmatpush2.msra.mxu0 0.0
  %612 = vmatprep.subr.mxu0 0.0
  %613 = vmatpush2.msra.mxu0 0.0
  %614 = vmatprep.subr.mxu0 0.0
  %615 = vmatpush2.msra.mxu0 0.0
  %616 = vmatprep.subr.mxu0 0.0
  %617 = vmatpush2.msra.mxu0 0.0
  %618 = vmatprep.mubr.f32.mxu0 0.0
  %619 = vmatmul.mubr.f32.gmra.mxu0 %v543
  %v620 = vpop.f32.mrf.mxu0
  %v621 = vadd.f32 %v524, %v620
  %v622 = vpop.f32.mrf.mxu0
  %623 = vmatprep.mubr.f32.mxu0 0.0
  %624 = vmatmul.mubr.f32.gmra.mxu0 %v546
  %v625 = vpop.f32.mrf.mxu0
  %v626 = vadd.f32 %v529, %v625
  %v627 = vpop.f32.mrf.mxu0
  %628 = vmatprep.mubr.f32.mxu0 0.0
  %629 = vmatmul.mubr.f32.gmra.mxu0 %v549
  %v630 = vpop.f32.mrf.mxu0
  %v631 = vadd.f32 %v534, %v630
  %v632 = vpop.f32.mrf.mxu0
  %633 = vmatprep.mubr.f32.mxu0 0.0
  %634 = vmatmul.mubr.f32.gmra.mxu0 %v552
  %v635 = vpop.f32.mrf.mxu0
  %v636 = vadd.f32 %v539, %v635
  %v637 = vpop.f32.mrf.mxu0
  %638 = vdwg.mxu0
  %s639 = scalar_lea.vmem %s5, 64
  %v640 = vld [vmem:[%s639] sm:$0xff]
  %v641 = vld [vmem:[%s639 + $0x8] sm:$0xff]
  %v642 = vld [vmem:[%s639 + $0x10] sm:$0xff]
  %v643 = vld [vmem:[%s639 + $0x18] sm:$0xff]
  %v644 = vld [vmem:[%s639 + $0x20] sm:$0xff]
  %v645 = vld [vmem:[%s639 + $0x28] sm:$0xff]
  %v646 = vld [vmem:[%s639 + $0x30] sm:$0xff]
  %v647 = vld [vmem:[%s639 + $0x38] sm:$0xff]
  %648 = vmatprep.subr.mxu0 0.0
  %649 = vmatpush1.msra.mxu0 0.0
  %650 = vmatprep.subr.mxu0 0.0
  %651 = vmatpush1.msra.mxu0 0.0
  %652 = vmatprep.subr.mxu0 0.0
  %653 = vmatpush1.msra.mxu0 0.0
  %654 = vmatprep.subr.mxu0 0.0
  %655 = vmatpush1.msra.mxu0 0.0
  %656 = vmatprep.subr.mxu0 0.0
  %657 = vmatpush1.msra.mxu0 0.0
  %658 = vmatprep.subr.mxu0 0.0
  %659 = vmatpush1.msra.mxu0 0.0
  %660 = vmatprep.subr.mxu0 0.0
  %661 = vmatpush1.msra.mxu0 0.0
  %662 = vmatprep.subr.mxu0 0.0
  %663 = vmatpush1.msra.mxu0 0.0
  %664 = vmatprep.subr.mxu0 0.0
  %665 = vmatpush1.msra.mxu0 %v647
  %666 = vmatprep.subr.mxu0 0.0
  %667 = vmatpush1.msra.mxu0 %v646
  %668 = vmatprep.subr.mxu0 0.0
  %669 = vmatpush1.msra.mxu0 %v645
  %670 = vmatprep.subr.mxu0 0.0
  %671 = vmatpush1.msra.mxu0 %v644
  %672 = vmatprep.subr.mxu0 0.0
  %673 = vmatpush1.msra.mxu0 %v643
  %674 = vmatprep.subr.mxu0 0.0
  %675 = vmatpush1.msra.mxu0 %v642
  %676 = vmatprep.subr.mxu0 0.0
  %677 = vmatpush1.msra.mxu0 %v641
  %678 = vmatprep.subr.mxu0 0.0
  %679 = vmatpush1.msra.mxu0 %v640
  %680 = vmatprep.subr.mxu0 0.0
  %681 = vmatpush2.msra.mxu0 0.0
  %682 = vmatprep.subr.mxu0 0.0
  %683 = vmatpush2.msra.mxu0 0.0
  %684 = vmatprep.subr.mxu0 0.0
  %685 = vmatpush2.msra.mxu0 0.0
  %686 = vmatprep.subr.mxu0 0.0
  %687 = vmatpush2.msra.mxu0 0.0
  %688 = vmatprep.subr.mxu0 0.0
  %689 = vmatpush2.msra.mxu0 0.0
  %690 = vmatprep.subr.mxu0 0.0
  %691 = vmatpush2.msra.mxu0 0.0
  %692 = vmatprep.subr.mxu0 0.0
  %693 = vmatpush2.msra.mxu0 0.0
  %694 = vmatprep.subr.mxu0 0.0
  %695 = vmatpush2.msra.mxu0 0.0
  %696 = vmatprep.subr.mxu0 0.0
  %697 = vmatpush2.msra.mxu0 0.0
  %698 = vmatprep.subr.mxu0 0.0
  %699 = vmatpush2.msra.mxu0 0.0
  %700 = vmatprep.subr.mxu0 0.0
  %701 = vmatpush2.msra.mxu0 0.0
  %702 = vmatprep.subr.mxu0 0.0
  %703 = vmatpush2.msra.mxu0 0.0
  %704 = vmatprep.subr.mxu0 0.0
  %705 = vmatpush2.msra.mxu0 0.0
  %706 = vmatprep.subr.mxu0 0.0
  %707 = vmatpush2.msra.mxu0 0.0
  %708 = vmatprep.subr.mxu0 0.0
  %709 = vmatpush2.msra.mxu0 0.0
  %710 = vmatprep.subr.mxu0 0.0
  %711 = vmatpush2.msra.mxu0 0.0
  %712 = vmatprep.mubr.f32.mxu0 0.0
  %713 = vmatmul.mubr.f32.gmra.mxu0 %v543
  %v714 = vpop.f32.mrf.mxu0
  %v715 = vadd.f32 0.0, %v714
  %v716 = vpop.f32.mrf.mxu0
  %717 = vmatprep.mubr.f32.mxu0 0.0
  %718 = vmatmul.mubr.f32.gmra.mxu0 %v546
  %v719 = vpop.f32.mrf.mxu0
  %v720 = vadd.f32 0.0, %v719
  %v721 = vpop.f32.mrf.mxu0
  %722 = vmatprep.mubr.f32.mxu0 0.0
  %723 = vmatmul.mubr.f32.gmra.mxu0 %v549
  %v724 = vpop.f32.mrf.mxu0
  %v725 = vadd.f32 0.0, %v724
  %v726 = vpop.f32.mrf.mxu0
  %727 = vmatprep.mubr.f32.mxu0 0.0
  %728 = vmatmul.mubr.f32.gmra.mxu0 %v552
  %v729 = vpop.f32.mrf.mxu0
  %v730 = vadd.f32 0.0, %v729
  %v731 = vpop.f32.mrf.mxu0
  %732 = vdwg.mxu0
  %vm733 = vcmask 261120
  %v735 = vsel %vm733, %v425, 0
  %v738 = vsel %vm733, %v426, 0
  %v741 = vsel %vm733, %v427, 0
  %v744 = vsel %vm733, %v428, 0
  %746 = vmatprep.subr.mxu0 0.0
  %747 = vmatpush1.msra.mxu0 0.0
  %748 = vmatprep.subr.mxu0 0.0
  %749 = vmatpush1.msra.mxu0 0.0
  %750 = vmatprep.subr.mxu0 0.0
  %751 = vmatpush1.msra.mxu0 0.0
  %752 = vmatprep.subr.mxu0 0.0
  %753 = vmatpush1.msra.mxu0 0.0
  %754 = vmatprep.subr.mxu0 0.0
  %755 = vmatpush1.msra.mxu0 0.0
  %756 = vmatprep.subr.mxu0 0.0
  %757 = vmatpush1.msra.mxu0 0.0
  %758 = vmatprep.subr.mxu0 0.0
  %759 = vmatpush1.msra.mxu0 0.0
  %760 = vmatprep.subr.mxu0 0.0
  %761 = vmatpush1.msra.mxu0 0.0
  %762 = vmatprep.subr.mxu0 0.0
  %763 = vmatpush1.msra.mxu0 0.0
  %764 = vmatprep.subr.mxu0 0.0
  %765 = vmatpush1.msra.mxu0 0.0
  %766 = vmatprep.subr.mxu0 0.0
  %767 = vmatpush1.msra.mxu0 0.0
  %768 = vmatprep.subr.mxu0 0.0
  %769 = vmatpush1.msra.mxu0 0.0
  %770 = vmatprep.subr.mxu0 0.0
  %771 = vmatpush1.msra.mxu0 %v636
  %772 = vmatprep.subr.mxu0 0.0
  %773 = vmatpush1.msra.mxu0 %v631
  %774 = vmatprep.subr.mxu0 0.0
  %775 = vmatpush1.msra.mxu0 %v626
  %776 = vmatprep.subr.mxu0 0.0
  %777 = vmatpush1.msra.mxu0 %v621
  %778 = vmatprep.subr.mxu0 0.0
  %779 = vmatpush2.msra.mxu0 0.0
  %780 = vmatprep.subr.mxu0 0.0
  %781 = vmatpush2.msra.mxu0 0.0
  %782 = vmatprep.subr.mxu0 0.0
  %783 = vmatpush2.msra.mxu0 0.0
  %784 = vmatprep.subr.mxu0 0.0
  %785 = vmatpush2.msra.mxu0 0.0
  %786 = vmatprep.subr.mxu0 0.0
  %787 = vmatpush2.msra.mxu0 0.0
  %788 = vmatprep.subr.mxu0 0.0
  %789 = vmatpush2.msra.mxu0 0.0
  %790 = vmatprep.subr.mxu0 0.0
  %791 = vmatpush2.msra.mxu0 0.0
  %792 = vmatprep.subr.mxu0 0.0
  %793 = vmatpush2.msra.mxu0 0.0
  %794 = vmatprep.subr.mxu0 0.0
  %795 = vmatpush2.msra.mxu0 0.0
  %796 = vmatprep.subr.mxu0 0.0
  %797 = vmatpush2.msra.mxu0 0.0
  %798 = vmatprep.subr.mxu0 0.0
  %799 = vmatpush2.msra.mxu0 0.0
  %800 = vmatprep.subr.mxu0 0.0
  %801 = vmatpush2.msra.mxu0 0.0
  %802 = vmatprep.subr.mxu0 0.0
  %803 = vmatpush2.msra.mxu0 0.0
  %804 = vmatprep.subr.mxu0 0.0
  %805 = vmatpush2.msra.mxu0 0.0
  %806 = vmatprep.subr.mxu0 0.0
  %807 = vmatpush2.msra.mxu0 0.0
  %808 = vmatprep.subr.mxu0 0.0
  %809 = vmatpush2.msra.mxu0 0.0
  %810 = vmatprep.mubr.f32.mxu0 0.0
  %811 = vmatmul.mubr.f32.gmra.mxu0 %v735
  %v812 = vpop.f32.mrf.mxu0
  %v813 = vadd.f32 %v715, %v812
  %v814 = vpop.f32.mrf.mxu0
  %815 = vmatprep.mubr.f32.mxu0 0.0
  %816 = vmatmul.mubr.f32.gmra.mxu0 %v738
  %v817 = vpop.f32.mrf.mxu0
  %v818 = vadd.f32 %v720, %v817
  %v819 = vpop.f32.mrf.mxu0
  %820 = vmatprep.mubr.f32.mxu0 0.0
  %821 = vmatmul.mubr.f32.gmra.mxu0 %v741
  %v822 = vpop.f32.mrf.mxu0
  %v823 = vadd.f32 %v725, %v822
  %v824 = vpop.f32.mrf.mxu0
  %825 = vmatprep.mubr.f32.mxu0 0.0
  %826 = vmatmul.mubr.f32.gmra.mxu0 %v744
  %v827 = vpop.f32.mrf.mxu0
  %v828 = vadd.f32 %v730, %v827
  %v829 = vpop.f32.mrf.mxu0
  %830 = vdwg.mxu0
  %s831 = scalar_lea.vmem %s6, 64
  %v832 = vld [vmem:[%s831] sm:$0xff]
  %v833 = vld [vmem:[%s831 + $0x8] sm:$0xff]
  %v834 = vld [vmem:[%s831 + $0x10] sm:$0xff]
  %v835 = vld [vmem:[%s831 + $0x18] sm:$0xff]
  %v836 = vld [vmem:[%s831 + $0x20] sm:$0xff]
  %v837 = vld [vmem:[%s831 + $0x28] sm:$0xff]
  %v838 = vld [vmem:[%s831 + $0x30] sm:$0xff]
  %v839 = vld [vmem:[%s831 + $0x38] sm:$0xff]
  %840 = vmatprep.subr.mxu0 0.0
  %841 = vmatpush1.msra.mxu0 0.0
  %842 = vmatprep.subr.mxu0 0.0
  %843 = vmatpush1.msra.mxu0 0.0
  %844 = vmatprep.subr.mxu0 0.0
  %845 = vmatpush1.msra.mxu0 0.0
  %846 = vmatprep.subr.mxu0 0.0
  %847 = vmatpush1.msra.mxu0 0.0
  %848 = vmatprep.subr.mxu0 0.0
  %849 = vmatpush1.msra.mxu0 0.0
  %850 = vmatprep.subr.mxu0 0.0
  %851 = vmatpush1.msra.mxu0 0.0
  %852 = vmatprep.subr.mxu0 0.0
  %853 = vmatpush1.msra.mxu0 0.0
  %854 = vmatprep.subr.mxu0 0.0
  %855 = vmatpush1.msra.mxu0 0.0
  %856 = vmatprep.subr.mxu0 0.0
  %857 = vmatpush1.msra.mxu0 %v839
  %858 = vmatprep.subr.mxu0 0.0
  %859 = vmatpush1.msra.mxu0 %v838
  %860 = vmatprep.subr.mxu0 0.0
  %861 = vmatpush1.msra.mxu0 %v837
  %862 = vmatprep.subr.mxu0 0.0
  %863 = vmatpush1.msra.mxu0 %v836
  %864 = vmatprep.subr.mxu0 0.0
  %865 = vmatpush1.msra.mxu0 %v835
  %866 = vmatprep.subr.mxu0 0.0
  %867 = vmatpush1.msra.mxu0 %v834
  %868 = vmatprep.subr.mxu0 0.0
  %869 = vmatpush1.msra.mxu0 %v833
  %870 = vmatprep.subr.mxu0 0.0
  %871 = vmatpush1.msra.mxu0 %v832
  %872 = vmatprep.subr.mxu0 0.0
  %873 = vmatpush2.msra.mxu0 0.0
  %874 = vmatprep.subr.mxu0 0.0
  %875 = vmatpush2.msra.mxu0 0.0
  %876 = vmatprep.subr.mxu0 0.0
  %877 = vmatpush2.msra.mxu0 0.0
  %878 = vmatprep.subr.mxu0 0.0
  %879 = vmatpush2.msra.mxu0 0.0
  %880 = vmatprep.subr.mxu0 0.0
  %881 = vmatpush2.msra.mxu0 0.0
  %882 = vmatprep.subr.mxu0 0.0
  %883 = vmatpush2.msra.mxu0 0.0
  %884 = vmatprep.subr.mxu0 0.0
  %885 = vmatpush2.msra.mxu0 0.0
  %886 = vmatprep.subr.mxu0 0.0
  %887 = vmatpush2.msra.mxu0 0.0
  %888 = vmatprep.subr.mxu0 0.0
  %889 = vmatpush2.msra.mxu0 0.0
  %890 = vmatprep.subr.mxu0 0.0
  %891 = vmatpush2.msra.mxu0 0.0
  %892 = vmatprep.subr.mxu0 0.0
  %893 = vmatpush2.msra.mxu0 0.0
  %894 = vmatprep.subr.mxu0 0.0
  %895 = vmatpush2.msra.mxu0 0.0
  %896 = vmatprep.subr.mxu0 0.0
  %897 = vmatpush2.msra.mxu0 0.0
  %898 = vmatprep.subr.mxu0 0.0
  %899 = vmatpush2.msra.mxu0 0.0
  %900 = vmatprep.subr.mxu0 0.0
  %901 = vmatpush2.msra.mxu0 0.0
  %902 = vmatprep.subr.mxu0 0.0
  %903 = vmatpush2.msra.mxu0 0.0
  %904 = vmatprep.mubr.f32.mxu0 0.0
  %905 = vmatmul.mubr.f32.gmra.mxu0 %v446
  %v906 = vpop.f32.mrf.mxu0
  %v907 = vadd.f32 0.0, %v906
  %v908 = vpop.f32.mrf.mxu0
  %909 = vmatprep.mubr.f32.mxu0 0.0
  %910 = vmatmul.mubr.f32.gmra.mxu0 %v449
  %v911 = vpop.f32.mrf.mxu0
  %v912 = vadd.f32 0.0, %v911
  %v913 = vpop.f32.mrf.mxu0
  %914 = vmatprep.mubr.f32.mxu0 0.0
  %915 = vmatmul.mubr.f32.gmra.mxu0 %v452
  %v916 = vpop.f32.mrf.mxu0
  %v917 = vadd.f32 0.0, %v916
  %v918 = vpop.f32.mrf.mxu0
  %919 = vmatprep.mubr.f32.mxu0 0.0
  %920 = vmatmul.mubr.f32.gmra.mxu0 %v455
  %v921 = vpop.f32.mrf.mxu0
  %v922 = vadd.f32 0.0, %v921
  %v923 = vpop.f32.mrf.mxu0
  %924 = vdwg.mxu0
  %v925 = vadd.f32 %v813, %v907
  %v926 = vadd.f32 %v818, %v912
  %v927 = vadd.f32 %v823, %v917
  %v928 = vadd.f32 %v828, %v922
  %s929 = scalar_lea.vmem %s4, 32
  %v930 = vld [vmem:[%s929] sm:$0xff]
  %v931 = vld [vmem:[%s929 + $0x8] sm:$0xff]
  %v932 = vld [vmem:[%s929 + $0x10] sm:$0xff]
  %v933 = vld [vmem:[%s929 + $0x18] sm:$0xff]
  %s934 = scalar_lea.vmem %s5, 128
  %v935 = vld [vmem:[%s934] sm:$0xff]
  %v936 = vld [vmem:[%s934 + $0x8] sm:$0xff]
  %v937 = vld [vmem:[%s934 + $0x10] sm:$0xff]
  %v938 = vld [vmem:[%s934 + $0x18] sm:$0xff]
  %v939 = vld [vmem:[%s934 + $0x20] sm:$0xff]
  %v940 = vld [vmem:[%s934 + $0x28] sm:$0xff]
  %v941 = vld [vmem:[%s934 + $0x30] sm:$0xff]
  %v942 = vld [vmem:[%s934 + $0x38] sm:$0xff]
  %s943 = scalar_lea.vmem %s6, 128
  %v944 = vld [vmem:[%s943] sm:$0xff]
  %v945 = vld [vmem:[%s943 + $0x8] sm:$0xff]
  %v946 = vld [vmem:[%s943 + $0x10] sm:$0xff]
  %v947 = vld [vmem:[%s943 + $0x18] sm:$0xff]
  %v948 = vld [vmem:[%s943 + $0x20] sm:$0xff]
  %v949 = vld [vmem:[%s943 + $0x28] sm:$0xff]
  %v950 = vld [vmem:[%s943 + $0x30] sm:$0xff]
  %v951 = vld [vmem:[%s943 + $0x38] sm:$0xff]
  %952 = vmatprep.subr.mxu0 0.0
  %953 = vmatpush1.msra.mxu0 0.0
  %954 = vmatprep.subr.mxu0 0.0
  %955 = vmatpush1.msra.mxu0 0.0
  %956 = vmatprep.subr.mxu0 0.0
  %957 = vmatpush1.msra.mxu0 0.0
  %958 = vmatprep.subr.mxu0 0.0
  %959 = vmatpush1.msra.mxu0 0.0
  %960 = vmatprep.subr.mxu0 0.0
  %961 = vmatpush1.msra.mxu0 0.0
  %962 = vmatprep.subr.mxu0 0.0
  %963 = vmatpush1.msra.mxu0 0.0
  %964 = vmatprep.subr.mxu0 0.0
  %965 = vmatpush1.msra.mxu0 0.0
  %966 = vmatprep.subr.mxu0 0.0
  %967 = vmatpush1.msra.mxu0 0.0
  %968 = vmatprep.subr.mxu0 0.0
  %969 = vmatpush1.msra.mxu0 %v951
  %970 = vmatprep.subr.mxu0 0.0
  %971 = vmatpush1.msra.mxu0 %v950
  %972 = vmatprep.subr.mxu0 0.0
  %973 = vmatpush1.msra.mxu0 %v949
  %974 = vmatprep.subr.mxu0 0.0
  %975 = vmatpush1.msra.mxu0 %v948
  %976 = vmatprep.subr.mxu0 0.0
  %977 = vmatpush1.msra.mxu0 %v947
  %978 = vmatprep.subr.mxu0 0.0
  %979 = vmatpush1.msra.mxu0 %v946
  %980 = vmatprep.subr.mxu0 0.0
  %981 = vmatpush1.msra.mxu0 %v945
  %982 = vmatprep.subr.mxu0 0.0
  %983 = vmatpush1.msra.mxu0 %v944
  %984 = vmatprep.subr.mxu0 0.0
  %985 = vmatpush2.msra.mxu0 0.0
  %986 = vmatprep.subr.mxu0 0.0
  %987 = vmatpush2.msra.mxu0 0.0
  %988 = vmatprep.subr.mxu0 0.0
  %989 = vmatpush2.msra.mxu0 0.0
  %990 = vmatprep.subr.mxu0 0.0
  %991 = vmatpush2.msra.mxu0 0.0
  %992 = vmatprep.subr.mxu0 0.0
  %993 = vmatpush2.msra.mxu0 0.0
  %994 = vmatprep.subr.mxu0 0.0
  %995 = vmatpush2.msra.mxu0 0.0
  %996 = vmatprep.subr.mxu0 0.0
  %997 = vmatpush2.msra.mxu0 0.0
  %998 = vmatprep.subr.mxu0 0.0
  %999 = vmatpush2.msra.mxu0 0.0
  %1000 = vmatprep.subr.mxu0 0.0
  %1001 = vmatpush2.msra.mxu0 0.0
  %1002 = vmatprep.subr.mxu0 0.0
  %1003 = vmatpush2.msra.mxu0 0.0
  %1004 = vmatprep.subr.mxu0 0.0
  %1005 = vmatpush2.msra.mxu0 0.0
  %1006 = vmatprep.subr.mxu0 0.0
  %1007 = vmatpush2.msra.mxu0 0.0
  %1008 = vmatprep.subr.mxu0 0.0
  %1009 = vmatpush2.msra.mxu0 0.0
  %1010 = vmatprep.subr.mxu0 0.0
  %1011 = vmatpush2.msra.mxu0 0.0
  %1012 = vmatprep.subr.mxu0 0.0
  %1013 = vmatpush2.msra.mxu0 0.0
  %1014 = vmatprep.subr.mxu0 0.0
  %1015 = vmatpush2.msra.mxu0 0.0
  %1016 = vmatprep.mubr.f32.mxu0 0.0
  %1017 = vmatmul.mubr.f32.gmra.mxu0 %v446
  %v1018 = vpop.f32.mrf.mxu0
  %v1019 = vadd.f32 0.0, %v1018
  %v1020 = vpop.f32.mrf.mxu0
  %1021 = vmatprep.mubr.f32.mxu0 0.0
  %1022 = vmatmul.mubr.f32.gmra.mxu0 %v449
  %v1023 = vpop.f32.mrf.mxu0
  %v1024 = vadd.f32 0.0, %v1023
  %v1025 = vpop.f32.mrf.mxu0
  %1026 = vmatprep.mubr.f32.mxu0 0.0
  %1027 = vmatmul.mubr.f32.gmra.mxu0 %v452
  %v1028 = vpop.f32.mrf.mxu0
  %v1029 = vadd.f32 0.0, %v1028
  %v1030 = vpop.f32.mrf.mxu0
  %1031 = vmatprep.mubr.f32.mxu0 0.0
  %1032 = vmatmul.mubr.f32.gmra.mxu0 %v455
  %v1033 = vpop.f32.mrf.mxu0
  %v1034 = vadd.f32 0.0, %v1033
  %v1035 = vpop.f32.mrf.mxu0
  %1036 = vdwg.mxu0
  %1037 = vmatprep.subr.mxu0 0.0
  %1038 = vmatpush1.msra.mxu0 0.0
  %1039 = vmatprep.subr.mxu0 0.0
  %1040 = vmatpush1.msra.mxu0 0.0
  %1041 = vmatprep.subr.mxu0 0.0
  %1042 = vmatpush1.msra.mxu0 0.0
  %1043 = vmatprep.subr.mxu0 0.0
  %1044 = vmatpush1.msra.mxu0 0.0
  %1045 = vmatprep.subr.mxu0 0.0
  %1046 = vmatpush1.msra.mxu0 0.0
  %1047 = vmatprep.subr.mxu0 0.0
  %1048 = vmatpush1.msra.mxu0 0.0
  %1049 = vmatprep.subr.mxu0 0.0
  %1050 = vmatpush1.msra.mxu0 0.0
  %1051 = vmatprep.subr.mxu0 0.0
  %1052 = vmatpush1.msra.mxu0 0.0
  %1053 = vmatprep.subr.mxu0 0.0
  %1054 = vmatpush1.msra.mxu0 %v942
  %1055 = vmatprep.subr.mxu0 0.0
  %1056 = vmatpush1.msra.mxu0 %v941
  %1057 = vmatprep.subr.mxu0 0.0
  %1058 = vmatpush1.msra.mxu0 %v940
  %1059 = vmatprep.subr.mxu0 0.0
  %1060 = vmatpush1.msra.mxu0 %v939
  %1061 = vmatprep.subr.mxu0 0.0
  %1062 = vmatpush1.msra.mxu0 %v938
  %1063 = vmatprep.subr.mxu0 0.0
  %1064 = vmatpush1.msra.mxu0 %v937
  %1065 = vmatprep.subr.mxu0 0.0
  %1066 = vmatpush1.msra.mxu0 %v936
  %1067 = vmatprep.subr.mxu0 0.0
  %1068 = vmatpush1.msra.mxu0 %v935
  %1069 = vmatprep.subr.mxu0 0.0
  %1070 = vmatpush2.msra.mxu0 0.0
  %1071 = vmatprep.subr.mxu0 0.0
  %1072 = vmatpush2.msra.mxu0 0.0
  %1073 = vmatprep.subr.mxu0 0.0
  %1074 = vmatpush2.msra.mxu0 0.0
  %1075 = vmatprep.subr.mxu0 0.0
  %1076 = vmatpush2.msra.mxu0 0.0
  %1077 = vmatprep.subr.mxu0 0.0
  %1078 = vmatpush2.msra.mxu0 0.0
  %1079 = vmatprep.subr.mxu0 0.0
  %1080 = vmatpush2.msra.mxu0 0.0
  %1081 = vmatprep.subr.mxu0 0.0
  %1082 = vmatpush2.msra.mxu0 0.0
  %1083 = vmatprep.subr.mxu0 0.0
  %1084 = vmatpush2.msra.mxu0 0.0
  %1085 = vmatprep.subr.mxu0 0.0
  %1086 = vmatpush2.msra.mxu0 0.0
  %1087 = vmatprep.subr.mxu0 0.0
  %1088 = vmatpush2.msra.mxu0 0.0
  %1089 = vmatprep.subr.mxu0 0.0
  %1090 = vmatpush2.msra.mxu0 0.0
  %1091 = vmatprep.subr.mxu0 0.0
  %1092 = vmatpush2.msra.mxu0 0.0
  %1093 = vmatprep.subr.mxu0 0.0
  %1094 = vmatpush2.msra.mxu0 0.0
  %1095 = vmatprep.subr.mxu0 0.0
  %1096 = vmatpush2.msra.mxu0 0.0
  %1097 = vmatprep.subr.mxu0 0.0
  %1098 = vmatpush2.msra.mxu0 0.0
  %1099 = vmatprep.subr.mxu0 0.0
  %1100 = vmatpush2.msra.mxu0 0.0
  %1101 = vmatprep.mubr.f32.mxu0 0.0
  %1102 = vmatmul.mubr.f32.gmra.mxu0 %v543
  %v1103 = vpop.f32.mrf.mxu0
  %v1104 = vadd.f32 %v1019, %v1103
  %v1105 = vpop.f32.mrf.mxu0
  %1106 = vmatprep.mubr.f32.mxu0 0.0
  %1107 = vmatmul.mubr.f32.gmra.mxu0 %v546
  %v1108 = vpop.f32.mrf.mxu0
  %v1109 = vadd.f32 %v1024, %v1108
  %v1110 = vpop.f32.mrf.mxu0
  %1111 = vmatprep.mubr.f32.mxu0 0.0
  %1112 = vmatmul.mubr.f32.gmra.mxu0 %v549
  %v1113 = vpop.f32.mrf.mxu0
  %v1114 = vadd.f32 %v1029, %v1113
  %v1115 = vpop.f32.mrf.mxu0
  %1116 = vmatprep.mubr.f32.mxu0 0.0
  %1117 = vmatmul.mubr.f32.gmra.mxu0 %v552
  %v1118 = vpop.f32.mrf.mxu0
  %v1119 = vadd.f32 %v1034, %v1118
  %v1120 = vpop.f32.mrf.mxu0
  %1121 = vdwg.mxu0
  %v1123 = vsel %vm733, %v930, 0
  %v1126 = vsel %vm733, %v931, 0
  %v1129 = vsel %vm733, %v932, 0
  %v1132 = vsel %vm733, %v933, 0
  %1134 = vmatprep.subr.mxu0 0.0
  %1135 = vmatpush1.msra.mxu0 0.0
  %1136 = vmatprep.subr.mxu0 0.0
  %1137 = vmatpush1.msra.mxu0 0.0
  %1138 = vmatprep.subr.mxu0 0.0
  %1139 = vmatpush1.msra.mxu0 0.0
  %1140 = vmatprep.subr.mxu0 0.0
  %1141 = vmatpush1.msra.mxu0 0.0
  %1142 = vmatprep.subr.mxu0 0.0
  %1143 = vmatpush1.msra.mxu0 0.0
  %1144 = vmatprep.subr.mxu0 0.0
  %1145 = vmatpush1.msra.mxu0 0.0
  %1146 = vmatprep.subr.mxu0 0.0
  %1147 = vmatpush1.msra.mxu0 0.0
  %1148 = vmatprep.subr.mxu0 0.0
  %1149 = vmatpush1.msra.mxu0 0.0
  %1150 = vmatprep.subr.mxu0 0.0
  %1151 = vmatpush1.msra.mxu0 0.0
  %1152 = vmatprep.subr.mxu0 0.0
  %1153 = vmatpush1.msra.mxu0 0.0
  %1154 = vmatprep.subr.mxu0 0.0
  %1155 = vmatpush1.msra.mxu0 0.0
  %1156 = vmatprep.subr.mxu0 0.0
  %1157 = vmatpush1.msra.mxu0 0.0
  %1158 = vmatprep.subr.mxu0 0.0
  %1159 = vmatpush1.msra.mxu0 %v1119
  %1160 = vmatprep.subr.mxu0 0.0
  %1161 = vmatpush1.msra.mxu0 %v1114
  %1162 = vmatprep.subr.mxu0 0.0
  %1163 = vmatpush1.msra.mxu0 %v1109
  %1164 = vmatprep.subr.mxu0 0.0
  %1165 = vmatpush1.msra.mxu0 %v1104
  %1166 = vmatprep.subr.mxu0 0.0
  %1167 = vmatpush2.msra.mxu0 0.0
  %1168 = vmatprep.subr.mxu0 0.0
  %1169 = vmatpush2.msra.mxu0 0.0
  %1170 = vmatprep.subr.mxu0 0.0
  %1171 = vmatpush2.msra.mxu0 0.0
  %1172 = vmatprep.subr.mxu0 0.0
  %1173 = vmatpush2.msra.mxu0 0.0
  %1174 = vmatprep.subr.mxu0 0.0
  %1175 = vmatpush2.msra.mxu0 0.0
  %1176 = vmatprep.subr.mxu0 0.0
  %1177 = vmatpush2.msra.mxu0 0.0
  %1178 = vmatprep.subr.mxu0 0.0
  %1179 = vmatpush2.msra.mxu0 0.0
  %1180 = vmatprep.subr.mxu0 0.0
  %1181 = vmatpush2.msra.mxu0 0.0
  %1182 = vmatprep.subr.mxu0 0.0
  %1183 = vmatpush2.msra.mxu0 0.0
  %1184 = vmatprep.subr.mxu0 0.0
  %1185 = vmatpush2.msra.mxu0 0.0
  %1186 = vmatprep.subr.mxu0 0.0
  %1187 = vmatpush2.msra.mxu0 0.0
  %1188 = vmatprep.subr.mxu0 0.0
  %1189 = vmatpush2.msra.mxu0 0.0
  %1190 = vmatprep.subr.mxu0 0.0
  %1191 = vmatpush2.msra.mxu0 0.0
  %1192 = vmatprep.subr.mxu0 0.0
  %1193 = vmatpush2.msra.mxu0 0.0
  %1194 = vmatprep.subr.mxu0 0.0
  %1195 = vmatpush2.msra.mxu0 0.0
  %1196 = vmatprep.subr.mxu0 0.0
  %1197 = vmatpush2.msra.mxu0 0.0
  %1198 = vmatprep.mubr.f32.mxu0 0.0
  %1199 = vmatmul.mubr.f32.gmra.mxu0 %v1123
  %v1200 = vpop.f32.mrf.mxu0
  %v1201 = vadd.f32 0.0, %v1200
  %v1202 = vpop.f32.mrf.mxu0
  %1203 = vmatprep.mubr.f32.mxu0 0.0
  %1204 = vmatmul.mubr.f32.gmra.mxu0 %v1126
  %v1205 = vpop.f32.mrf.mxu0
  %v1206 = vadd.f32 0.0, %v1205
  %v1207 = vpop.f32.mrf.mxu0
  %1208 = vmatprep.mubr.f32.mxu0 0.0
  %1209 = vmatmul.mubr.f32.gmra.mxu0 %v1129
  %v1210 = vpop.f32.mrf.mxu0
  %v1211 = vadd.f32 0.0, %v1210
  %v1212 = vpop.f32.mrf.mxu0
  %1213 = vmatprep.mubr.f32.mxu0 0.0
  %1214 = vmatmul.mubr.f32.gmra.mxu0 %v1132
  %v1215 = vpop.f32.mrf.mxu0
  %v1216 = vadd.f32 0.0, %v1215
  %v1217 = vpop.f32.mrf.mxu0
  %1218 = vdwg.mxu0
  %v1219 = vadd.f32 %v925, %v1201
  %v1220 = vadd.f32 %v926, %v1206
  %v1221 = vadd.f32 %v927, %v1211
  %v1222 = vadd.f32 %v928, %v1216
  %v1223 = vlaneseq
  %v1224 = vshrl.u32 %v1223, 7
  %v1225 = vsub.s32 1, %v1224
  %v1226 = vrot.slane %v38, %v1225
  %v1227 = vmul.f32 %v1219, %v1226
  %v1228 = vmul.f32 %v1220, %v1226
  %v1229 = vmul.f32 %v1221, %v1226
  %v1230 = vmul.f32 %v1222, %v1226
  %v1231 = vlaneseq
  %v1232 = vshrl.u32 %v1231, 7
  %v1233 = vsub.s32 2, %v1232
  %v1234 = vrot.slane %v38, %v1233
  %v1235 = vadd.f32 %v1227, %v1234
  %v1236 = vadd.f32 %v1228, %v1234
  %v1237 = vadd.f32 %v1229, %v1234
  %v1238 = vadd.f32 %v1230, %v1234
  %v1239 = vmax.f32 %v1235, 0.0
  %v1240 = vmax.f32 %v1236, 0.0
  %v1241 = vmax.f32 %v1237, 0.0
  %v1242 = vmax.f32 %v1238, 0.0
  %v1243 = vld [vmem:[%s7] sm:$0xff]
  %v1244 = vld [vmem:[%s7 + $0x8] sm:$0xff]
  %v1245 = vld [vmem:[%s7 + $0x10] sm:$0xff]
  %v1246 = vld [vmem:[%s7 + $0x18] sm:$0xff]
  %v1247 = vld [vmem:[%s7 + $0x20] sm:$0xff]
  %v1248 = vld [vmem:[%s7 + $0x28] sm:$0xff]
  %v1249 = vld [vmem:[%s7 + $0x30] sm:$0xff]
  %v1250 = vld [vmem:[%s7 + $0x38] sm:$0xff]
  %v1252 = vsel %vm51, %v1239, 0
  %v1255 = vsel %vm51, %v1240, 0
  %v1258 = vsel %vm51, %v1241, 0
  %v1261 = vsel %vm51, %v1242, 0
  %1263 = vmatprep.subr.mxu0 0.0
  %1264 = vmatpush1.msra.mxu0 0.0
  %1265 = vmatprep.subr.mxu0 0.0
  %1266 = vmatpush1.msra.mxu0 0.0
  %1267 = vmatprep.subr.mxu0 0.0
  %1268 = vmatpush1.msra.mxu0 0.0
  %1269 = vmatprep.subr.mxu0 0.0
  %1270 = vmatpush1.msra.mxu0 0.0
  %1271 = vmatprep.subr.mxu0 0.0
  %1272 = vmatpush1.msra.mxu0 0.0
  %1273 = vmatprep.subr.mxu0 0.0
  %1274 = vmatpush1.msra.mxu0 0.0
  %1275 = vmatprep.subr.mxu0 0.0
  %1276 = vmatpush1.msra.mxu0 0.0
  %1277 = vmatprep.subr.mxu0 0.0
  %1278 = vmatpush1.msra.mxu0 0.0
  %1279 = vmatprep.subr.mxu0 0.0
  %1280 = vmatpush1.msra.mxu0 %v1250
  %1281 = vmatprep.subr.mxu0 0.0
  %1282 = vmatpush1.msra.mxu0 %v1249
  %1283 = vmatprep.subr.mxu0 0.0
  %1284 = vmatpush1.msra.mxu0 %v1248
  %1285 = vmatprep.subr.mxu0 0.0
  %1286 = vmatpush1.msra.mxu0 %v1247
  %1287 = vmatprep.subr.mxu0 0.0
  %1288 = vmatpush1.msra.mxu0 %v1246
  %1289 = vmatprep.subr.mxu0 0.0
  %1290 = vmatpush1.msra.mxu0 %v1245
  %1291 = vmatprep.subr.mxu0 0.0
  %1292 = vmatpush1.msra.mxu0 %v1244
  %1293 = vmatprep.subr.mxu0 0.0
  %1294 = vmatpush1.msra.mxu0 %v1243
  %1295 = vmatprep.subr.mxu0 0.0
  %1296 = vmatpush2.msra.mxu0 0.0
  %1297 = vmatprep.subr.mxu0 0.0
  %1298 = vmatpush2.msra.mxu0 0.0
  %1299 = vmatprep.subr.mxu0 0.0
  %1300 = vmatpush2.msra.mxu0 0.0
  %1301 = vmatprep.subr.mxu0 0.0
  %1302 = vmatpush2.msra.mxu0 0.0
  %1303 = vmatprep.subr.mxu0 0.0
  %1304 = vmatpush2.msra.mxu0 0.0
  %1305 = vmatprep.subr.mxu0 0.0
  %1306 = vmatpush2.msra.mxu0 0.0
  %1307 = vmatprep.subr.mxu0 0.0
  %1308 = vmatpush2.msra.mxu0 0.0
  %1309 = vmatprep.subr.mxu0 0.0
  %1310 = vmatpush2.msra.mxu0 0.0
  %1311 = vmatprep.subr.mxu0 0.0
  %1312 = vmatpush2.msra.mxu0 0.0
  %1313 = vmatprep.subr.mxu0 0.0
  %1314 = vmatpush2.msra.mxu0 0.0
  %1315 = vmatprep.subr.mxu0 0.0
  %1316 = vmatpush2.msra.mxu0 0.0
  %1317 = vmatprep.subr.mxu0 0.0
  %1318 = vmatpush2.msra.mxu0 0.0
  %1319 = vmatprep.subr.mxu0 0.0
  %1320 = vmatpush2.msra.mxu0 0.0
  %1321 = vmatprep.subr.mxu0 0.0
  %1322 = vmatpush2.msra.mxu0 0.0
  %1323 = vmatprep.subr.mxu0 0.0
  %1324 = vmatpush2.msra.mxu0 0.0
  %1325 = vmatprep.subr.mxu0 0.0
  %1326 = vmatpush2.msra.mxu0 0.0
  %1327 = vmatprep.mubr.f32.mxu0 0.0
  %1328 = vmatmul.mubr.f32.gmra.mxu0 %v1252
  %v1329 = vpop.f32.mrf.mxu0
  %v1330 = vadd.f32 0.0, %v1329
  %v1331 = vpop.f32.mrf.mxu0
  %1332 = vmatprep.mubr.f32.mxu0 0.0
  %1333 = vmatmul.mubr.f32.gmra.mxu0 %v1255
  %v1334 = vpop.f32.mrf.mxu0
  %v1335 = vadd.f32 0.0, %v1334
  %v1336 = vpop.f32.mrf.mxu0
  %1337 = vmatprep.mubr.f32.mxu0 0.0
  %1338 = vmatmul.mubr.f32.gmra.mxu0 %v1258
  %v1339 = vpop.f32.mrf.mxu0
  %v1340 = vadd.f32 0.0, %v1339
  %v1341 = vpop.f32.mrf.mxu0
  %1342 = vmatprep.mubr.f32.mxu0 0.0
  %1343 = vmatmul.mubr.f32.gmra.mxu0 %v1261
  %v1344 = vpop.f32.mrf.mxu0
  %v1345 = vadd.f32 0.0, %v1344
  %v1346 = vpop.f32.mrf.mxu0
  %1347 = vdwg.mxu0
  %s1348 = scalar_lea.vmem %s7, 64
  %v1349 = vld [vmem:[%s1348] sm:$0xff]
  %v1350 = vld [vmem:[%s1348 + $0x8] sm:$0xff]
  %v1351 = vld [vmem:[%s1348 + $0x10] sm:$0xff]
  %v1352 = vld [vmem:[%s1348 + $0x18] sm:$0xff]
  %v1353 = vld [vmem:[%s1348 + $0x20] sm:$0xff]
  %v1354 = vld [vmem:[%s1348 + $0x28] sm:$0xff]
  %v1355 = vld [vmem:[%s1348 + $0x30] sm:$0xff]
  %v1356 = vld [vmem:[%s1348 + $0x38] sm:$0xff]
  %1357 = vmatprep.subr.mxu0 0.0
  %1358 = vmatpush1.msra.mxu0 0.0
  %1359 = vmatprep.subr.mxu0 0.0
  %1360 = vmatpush1.msra.mxu0 0.0
  %1361 = vmatprep.subr.mxu0 0.0
  %1362 = vmatpush1.msra.mxu0 0.0
  %1363 = vmatprep.subr.mxu0 0.0
  %1364 = vmatpush1.msra.mxu0 0.0
  %1365 = vmatprep.subr.mxu0 0.0
  %1366 = vmatpush1.msra.mxu0 0.0
  %1367 = vmatprep.subr.mxu0 0.0
  %1368 = vmatpush1.msra.mxu0 0.0
  %1369 = vmatprep.subr.mxu0 0.0
  %1370 = vmatpush1.msra.mxu0 0.0
  %1371 = vmatprep.subr.mxu0 0.0
  %1372 = vmatpush1.msra.mxu0 0.0
  %1373 = vmatprep.subr.mxu0 0.0
  %1374 = vmatpush1.msra.mxu0 %v1356
  %1375 = vmatprep.subr.mxu0 0.0
  %1376 = vmatpush1.msra.mxu0 %v1355
  %1377 = vmatprep.subr.mxu0 0.0
  %1378 = vmatpush1.msra.mxu0 %v1354
  %1379 = vmatprep.subr.mxu0 0.0
  %1380 = vmatpush1.msra.mxu0 %v1353
  %1381 = vmatprep.subr.mxu0 0.0
  %1382 = vmatpush1.msra.mxu0 %v1352
  %1383 = vmatprep.subr.mxu0 0.0
  %1384 = vmatpush1.msra.mxu0 %v1351
  %1385 = vmatprep.subr.mxu0 0.0
  %1386 = vmatpush1.msra.mxu0 %v1350
  %1387 = vmatprep.subr.mxu0 0.0
  %1388 = vmatpush1.msra.mxu0 %v1349
  %1389 = vmatprep.subr.mxu0 0.0
  %1390 = vmatpush2.msra.mxu0 0.0
  %1391 = vmatprep.subr.mxu0 0.0
  %1392 = vmatpush2.msra.mxu0 0.0
  %1393 = vmatprep.subr.mxu0 0.0
  %1394 = vmatpush2.msra.mxu0 0.0
  %1395 = vmatprep.subr.mxu0 0.0
  %1396 = vmatpush2.msra.mxu0 0.0
  %1397 = vmatprep.subr.mxu0 0.0
  %1398 = vmatpush2.msra.mxu0 0.0
  %1399 = vmatprep.subr.mxu0 0.0
  %1400 = vmatpush2.msra.mxu0 0.0
  %1401 = vmatprep.subr.mxu0 0.0
  %1402 = vmatpush2.msra.mxu0 0.0
  %1403 = vmatprep.subr.mxu0 0.0
  %1404 = vmatpush2.msra.mxu0 0.0
  %1405 = vmatprep.subr.mxu0 0.0
  %1406 = vmatpush2.msra.mxu0 0.0
  %1407 = vmatprep.subr.mxu0 0.0
  %1408 = vmatpush2.msra.mxu0 0.0
  %1409 = vmatprep.subr.mxu0 0.0
  %1410 = vmatpush2.msra.mxu0 0.0
  %1411 = vmatprep.subr.mxu0 0.0
  %1412 = vmatpush2.msra.mxu0 0.0
  %1413 = vmatprep.subr.mxu0 0.0
  %1414 = vmatpush2.msra.mxu0 0.0
  %1415 = vmatprep.subr.mxu0 0.0
  %1416 = vmatpush2.msra.mxu0 0.0
  %1417 = vmatprep.subr.mxu0 0.0
  %1418 = vmatpush2.msra.mxu0 0.0
  %1419 = vmatprep.subr.mxu0 0.0
  %1420 = vmatpush2.msra.mxu0 0.0
  %1421 = vmatprep.mubr.f32.mxu0 0.0
  %1422 = vmatmul.mubr.f32.gmra.mxu0 %v1252
  %v1423 = vpop.f32.mrf.mxu0
  %v1424 = vadd.f32 0.0, %v1423
  %v1425 = vpop.f32.mrf.mxu0
  %1426 = vmatprep.mubr.f32.mxu0 0.0
  %1427 = vmatmul.mubr.f32.gmra.mxu0 %v1255
  %v1428 = vpop.f32.mrf.mxu0
  %v1429 = vadd.f32 0.0, %v1428
  %v1430 = vpop.f32.mrf.mxu0
  %1431 = vmatprep.mubr.f32.mxu0 0.0
  %1432 = vmatmul.mubr.f32.gmra.mxu0 %v1258
  %v1433 = vpop.f32.mrf.mxu0
  %v1434 = vadd.f32 0.0, %v1433
  %v1435 = vpop.f32.mrf.mxu0
  %1436 = vmatprep.mubr.f32.mxu0 0.0
  %1437 = vmatmul.mubr.f32.gmra.mxu0 %v1261
  %v1438 = vpop.f32.mrf.mxu0
  %v1439 = vadd.f32 0.0, %v1438
  %v1440 = vpop.f32.mrf.mxu0
  %1441 = vdwg.mxu0
  %1442 = vmatprep.subr.mxu0 0.0
  %1443 = vmatpush1.msra.mxu0 0.0
  %1444 = vmatprep.subr.mxu0 0.0
  %1445 = vmatpush1.msra.mxu0 0.0
  %1446 = vmatprep.subr.mxu0 0.0
  %1447 = vmatpush1.msra.mxu0 0.0
  %1448 = vmatprep.subr.mxu0 0.0
  %1449 = vmatpush1.msra.mxu0 0.0
  %1450 = vmatprep.subr.mxu0 0.0
  %1451 = vmatpush1.msra.mxu0 0.0
  %1452 = vmatprep.subr.mxu0 0.0
  %1453 = vmatpush1.msra.mxu0 0.0
  %1454 = vmatprep.subr.mxu0 0.0
  %1455 = vmatpush1.msra.mxu0 0.0
  %1456 = vmatprep.subr.mxu0 0.0
  %1457 = vmatpush1.msra.mxu0 0.0
  %1458 = vmatprep.subr.mxu0 0.0
  %1459 = vmatpush1.msra.mxu0 0.0
  %1460 = vmatprep.subr.mxu0 0.0
  %1461 = vmatpush1.msra.mxu0 0.0
  %1462 = vmatprep.subr.mxu0 0.0
  %1463 = vmatpush1.msra.mxu0 0.0
  %1464 = vmatprep.subr.mxu0 0.0
  %1465 = vmatpush1.msra.mxu0 0.0
  %1466 = vmatprep.subr.mxu0 0.0
  %1467 = vmatpush1.msra.mxu0 %v1345
  %1468 = vmatprep.subr.mxu0 0.0
  %1469 = vmatpush1.msra.mxu0 %v1340
  %1470 = vmatprep.subr.mxu0 0.0
  %1471 = vmatpush1.msra.mxu0 %v1335
  %1472 = vmatprep.subr.mxu0 0.0
  %1473 = vmatpush1.msra.mxu0 %v1330
  %1474 = vmatprep.subr.mxu0 0.0
  %1475 = vmatpush2.msra.mxu0 0.0
  %1476 = vmatprep.subr.mxu0 0.0
  %1477 = vmatpush2.msra.mxu0 0.0
  %1478 = vmatprep.subr.mxu0 0.0
  %1479 = vmatpush2.msra.mxu0 0.0
  %1480 = vmatprep.subr.mxu0 0.0
  %1481 = vmatpush2.msra.mxu0 0.0
  %1482 = vmatprep.subr.mxu0 0.0
  %1483 = vmatpush2.msra.mxu0 0.0
  %1484 = vmatprep.subr.mxu0 0.0
  %1485 = vmatpush2.msra.mxu0 0.0
  %1486 = vmatprep.subr.mxu0 0.0
  %1487 = vmatpush2.msra.mxu0 0.0
  %1488 = vmatprep.subr.mxu0 0.0
  %1489 = vmatpush2.msra.mxu0 0.0
  %1490 = vmatprep.subr.mxu0 0.0
  %1491 = vmatpush2.msra.mxu0 0.0
  %1492 = vmatprep.subr.mxu0 0.0
  %1493 = vmatpush2.msra.mxu0 0.0
  %1494 = vmatprep.subr.mxu0 0.0
  %1495 = vmatpush2.msra.mxu0 0.0
  %1496 = vmatprep.subr.mxu0 0.0
  %1497 = vmatpush2.msra.mxu0 0.0
  %1498 = vmatprep.subr.mxu0 0.0
  %1499 = vmatpush2.msra.mxu0 0.0
  %1500 = vmatprep.subr.mxu0 0.0
  %1501 = vmatpush2.msra.mxu0 0.0
  %1502 = vmatprep.subr.mxu0 0.0
  %1503 = vmatpush2.msra.mxu0 0.0
  %1504 = vmatprep.subr.mxu0 0.0
  %1505 = vmatpush2.msra.mxu0 0.0
  %1506 = vmatprep.mubr.f32.mxu0 0.0
  %1507 = vmatmul.mubr.f32.gmra.mxu0 %v735
  %v1508 = vpop.f32.mrf.mxu0
  %v1509 = vadd.f32 %v1424, %v1508
  %v1510 = vpop.f32.mrf.mxu0
  %1511 = vmatprep.mubr.f32.mxu0 0.0
  %1512 = vmatmul.mubr.f32.gmra.mxu0 %v738
  %v1513 = vpop.f32.mrf.mxu0
  %v1514 = vadd.f32 %v1429, %v1513
  %v1515 = vpop.f32.mrf.mxu0
  %1516 = vmatprep.mubr.f32.mxu0 0.0
  %1517 = vmatmul.mubr.f32.gmra.mxu0 %v741
  %v1518 = vpop.f32.mrf.mxu0
  %v1519 = vadd.f32 %v1434, %v1518
  %v1520 = vpop.f32.mrf.mxu0
  %1521 = vmatprep.mubr.f32.mxu0 0.0
  %1522 = vmatmul.mubr.f32.gmra.mxu0 %v744
  %v1523 = vpop.f32.mrf.mxu0
  %v1524 = vadd.f32 %v1439, %v1523
  %v1525 = vpop.f32.mrf.mxu0
  %1526 = vdwg.mxu0
  %s1527 = scalar_lea.vmem %s7, 128
  %v1528 = vld [vmem:[%s1527] sm:$0xff]
  %v1529 = vld [vmem:[%s1527 + $0x8] sm:$0xff]
  %v1530 = vld [vmem:[%s1527 + $0x10] sm:$0xff]
  %v1531 = vld [vmem:[%s1527 + $0x18] sm:$0xff]
  %v1532 = vld [vmem:[%s1527 + $0x20] sm:$0xff]
  %v1533 = vld [vmem:[%s1527 + $0x28] sm:$0xff]
  %v1534 = vld [vmem:[%s1527 + $0x30] sm:$0xff]
  %v1535 = vld [vmem:[%s1527 + $0x38] sm:$0xff]
  %1536 = vmatprep.subr.mxu0 0.0
  %1537 = vmatpush1.msra.mxu0 0.0
  %1538 = vmatprep.subr.mxu0 0.0
  %1539 = vmatpush1.msra.mxu0 0.0
  %1540 = vmatprep.subr.mxu0 0.0
  %1541 = vmatpush1.msra.mxu0 0.0
  %1542 = vmatprep.subr.mxu0 0.0
  %1543 = vmatpush1.msra.mxu0 0.0
  %1544 = vmatprep.subr.mxu0 0.0
  %1545 = vmatpush1.msra.mxu0 0.0
  %1546 = vmatprep.subr.mxu0 0.0
  %1547 = vmatpush1.msra.mxu0 0.0
  %1548 = vmatprep.subr.mxu0 0.0
  %1549 = vmatpush1.msra.mxu0 0.0
  %1550 = vmatprep.subr.mxu0 0.0
  %1551 = vmatpush1.msra.mxu0 0.0
  %1552 = vmatprep.subr.mxu0 0.0
  %1553 = vmatpush1.msra.mxu0 %v1535
  %1554 = vmatprep.subr.mxu0 0.0
  %1555 = vmatpush1.msra.mxu0 %v1534
  %1556 = vmatprep.subr.mxu0 0.0
  %1557 = vmatpush1.msra.mxu0 %v1533
  %1558 = vmatprep.subr.mxu0 0.0
  %1559 = vmatpush1.msra.mxu0 %v1532
  %1560 = vmatprep.subr.mxu0 0.0
  %1561 = vmatpush1.msra.mxu0 %v1531
  %1562 = vmatprep.subr.mxu0 0.0
  %1563 = vmatpush1.msra.mxu0 %v1530
  %1564 = vmatprep.subr.mxu0 0.0
  %1565 = vmatpush1.msra.mxu0 %v1529
  %1566 = vmatprep.subr.mxu0 0.0
  %1567 = vmatpush1.msra.mxu0 %v1528
  %1568 = vmatprep.subr.mxu0 0.0
  %1569 = vmatpush2.msra.mxu0 0.0
  %1570 = vmatprep.subr.mxu0 0.0
  %1571 = vmatpush2.msra.mxu0 0.0
  %1572 = vmatprep.subr.mxu0 0.0
  %1573 = vmatpush2.msra.mxu0 0.0
  %1574 = vmatprep.subr.mxu0 0.0
  %1575 = vmatpush2.msra.mxu0 0.0
  %1576 = vmatprep.subr.mxu0 0.0
  %1577 = vmatpush2.msra.mxu0 0.0
  %1578 = vmatprep.subr.mxu0 0.0
  %1579 = vmatpush2.msra.mxu0 0.0
  %1580 = vmatprep.subr.mxu0 0.0
  %1581 = vmatpush2.msra.mxu0 0.0
  %1582 = vmatprep.subr.mxu0 0.0
  %1583 = vmatpush2.msra.mxu0 0.0
  %1584 = vmatprep.subr.mxu0 0.0
  %1585 = vmatpush2.msra.mxu0 0.0
  %1586 = vmatprep.subr.mxu0 0.0
  %1587 = vmatpush2.msra.mxu0 0.0
  %1588 = vmatprep.subr.mxu0 0.0
  %1589 = vmatpush2.msra.mxu0 0.0
  %1590 = vmatprep.subr.mxu0 0.0
  %1591 = vmatpush2.msra.mxu0 0.0
  %1592 = vmatprep.subr.mxu0 0.0
  %1593 = vmatpush2.msra.mxu0 0.0
  %1594 = vmatprep.subr.mxu0 0.0
  %1595 = vmatpush2.msra.mxu0 0.0
  %1596 = vmatprep.subr.mxu0 0.0
  %1597 = vmatpush2.msra.mxu0 0.0
  %1598 = vmatprep.subr.mxu0 0.0
  %1599 = vmatpush2.msra.mxu0 0.0
  %1600 = vmatprep.mubr.f32.mxu0 0.0
  %1601 = vmatmul.mubr.f32.gmra.mxu0 %v1252
  %v1602 = vpop.f32.mrf.mxu0
  %v1603 = vadd.f32 0.0, %v1602
  %v1604 = vpop.f32.mrf.mxu0
  %1605 = vmatprep.mubr.f32.mxu0 0.0
  %1606 = vmatmul.mubr.f32.gmra.mxu0 %v1255
  %v1607 = vpop.f32.mrf.mxu0
  %v1608 = vadd.f32 0.0, %v1607
  %v1609 = vpop.f32.mrf.mxu0
  %1610 = vmatprep.mubr.f32.mxu0 0.0
  %1611 = vmatmul.mubr.f32.gmra.mxu0 %v1258
  %v1612 = vpop.f32.mrf.mxu0
  %v1613 = vadd.f32 0.0, %v1612
  %v1614 = vpop.f32.mrf.mxu0
  %1615 = vmatprep.mubr.f32.mxu0 0.0
  %1616 = vmatmul.mubr.f32.gmra.mxu0 %v1261
  %v1617 = vpop.f32.mrf.mxu0
  %v1618 = vadd.f32 0.0, %v1617
  %v1619 = vpop.f32.mrf.mxu0
  %1620 = vdwg.mxu0
  %1621 = vmatprep.subr.mxu0 0.0
  %1622 = vmatpush1.msra.mxu0 0.0
  %1623 = vmatprep.subr.mxu0 0.0
  %1624 = vmatpush1.msra.mxu0 0.0
  %1625 = vmatprep.subr.mxu0 0.0
  %1626 = vmatpush1.msra.mxu0 0.0
  %1627 = vmatprep.subr.mxu0 0.0
  %1628 = vmatpush1.msra.mxu0 0.0
  %1629 = vmatprep.subr.mxu0 0.0
  %1630 = vmatpush1.msra.mxu0 0.0
  %1631 = vmatprep.subr.mxu0 0.0
  %1632 = vmatpush1.msra.mxu0 0.0
  %1633 = vmatprep.subr.mxu0 0.0
  %1634 = vmatpush1.msra.mxu0 0.0
  %1635 = vmatprep.subr.mxu0 0.0
  %1636 = vmatpush1.msra.mxu0 0.0
  %1637 = vmatprep.subr.mxu0 0.0
  %1638 = vmatpush1.msra.mxu0 0.0
  %1639 = vmatprep.subr.mxu0 0.0
  %1640 = vmatpush1.msra.mxu0 0.0
  %1641 = vmatprep.subr.mxu0 0.0
  %1642 = vmatpush1.msra.mxu0 0.0
  %1643 = vmatprep.subr.mxu0 0.0
  %1644 = vmatpush1.msra.mxu0 0.0
  %1645 = vmatprep.subr.mxu0 0.0
  %1646 = vmatpush1.msra.mxu0 %v1618
  %1647 = vmatprep.subr.mxu0 0.0
  %1648 = vmatpush1.msra.mxu0 %v1613
  %1649 = vmatprep.subr.mxu0 0.0
  %1650 = vmatpush1.msra.mxu0 %v1608
  %1651 = vmatprep.subr.mxu0 0.0
  %1652 = vmatpush1.msra.mxu0 %v1603
  %1653 = vmatprep.subr.mxu0 0.0
  %1654 = vmatpush2.msra.mxu0 0.0
  %1655 = vmatprep.subr.mxu0 0.0
  %1656 = vmatpush2.msra.mxu0 0.0
  %1657 = vmatprep.subr.mxu0 0.0
  %1658 = vmatpush2.msra.mxu0 0.0
  %1659 = vmatprep.subr.mxu0 0.0
  %1660 = vmatpush2.msra.mxu0 0.0
  %1661 = vmatprep.subr.mxu0 0.0
  %1662 = vmatpush2.msra.mxu0 0.0
  %1663 = vmatprep.subr.mxu0 0.0
  %1664 = vmatpush2.msra.mxu0 0.0
  %1665 = vmatprep.subr.mxu0 0.0
  %1666 = vmatpush2.msra.mxu0 0.0
  %1667 = vmatprep.subr.mxu0 0.0
  %1668 = vmatpush2.msra.mxu0 0.0
  %1669 = vmatprep.subr.mxu0 0.0
  %1670 = vmatpush2.msra.mxu0 0.0
  %1671 = vmatprep.subr.mxu0 0.0
  %1672 = vmatpush2.msra.mxu0 0.0
  %1673 = vmatprep.subr.mxu0 0.0
  %1674 = vmatpush2.msra.mxu0 0.0
  %1675 = vmatprep.subr.mxu0 0.0
  %1676 = vmatpush2.msra.mxu0 0.0
  %1677 = vmatprep.subr.mxu0 0.0
  %1678 = vmatpush2.msra.mxu0 0.0
  %1679 = vmatprep.subr.mxu0 0.0
  %1680 = vmatpush2.msra.mxu0 0.0
  %1681 = vmatprep.subr.mxu0 0.0
  %1682 = vmatpush2.msra.mxu0 0.0
  %1683 = vmatprep.subr.mxu0 0.0
  %1684 = vmatpush2.msra.mxu0 0.0
  %1685 = vmatprep.mubr.f32.mxu0 0.0
  %1686 = vmatmul.mubr.f32.gmra.mxu0 %v1123
  %v1687 = vpop.f32.mrf.mxu0
  %v1688 = vadd.f32 0.0, %v1687
  %v1689 = vpop.f32.mrf.mxu0
  %1690 = vmatprep.mubr.f32.mxu0 0.0
  %1691 = vmatmul.mubr.f32.gmra.mxu0 %v1126
  %v1692 = vpop.f32.mrf.mxu0
  %v1693 = vadd.f32 0.0, %v1692
  %v1694 = vpop.f32.mrf.mxu0
  %1695 = vmatprep.mubr.f32.mxu0 0.0
  %1696 = vmatmul.mubr.f32.gmra.mxu0 %v1129
  %v1697 = vpop.f32.mrf.mxu0
  %v1698 = vadd.f32 0.0, %v1697
  %v1699 = vpop.f32.mrf.mxu0
  %1700 = vmatprep.mubr.f32.mxu0 0.0
  %1701 = vmatmul.mubr.f32.gmra.mxu0 %v1132
  %v1702 = vpop.f32.mrf.mxu0
  %v1703 = vadd.f32 0.0, %v1702
  %v1704 = vpop.f32.mrf.mxu0
  %1705 = vdwg.mxu0
  %v1706 = vadd.f32 %v1509, %v1688
  %v1707 = vadd.f32 %v1514, %v1693
  %v1708 = vadd.f32 %v1519, %v1698
  %v1709 = vadd.f32 %v1524, %v1703
  %v1710 = vlaneseq
  %v1711 = vshrl.u32 %v1710, 7
  %v1712 = vsub.s32 3, %v1711
  %v1713 = vrot.slane %v38, %v1712
  %v1714 = vmul.f32 %v1706, %v1713
  %v1715 = vmul.f32 %v1707, %v1713
  %v1716 = vmul.f32 %v1708, %v1713
  %v1717 = vmul.f32 %v1709, %v1713
  %v1718 = vlaneseq
  %v1719 = vshrl.u32 %v1718, 7
  %v1720 = vsub.s32 4, %v1719
  %v1721 = vrot.slane %v38, %v1720
  %v1722 = vadd.f32 %v1714, %v1721
  %v1723 = vadd.f32 %v1715, %v1721
  %v1724 = vadd.f32 %v1716, %v1721
  %v1725 = vadd.f32 %v1717, %v1721
  %v1726 = vmax.f32 %v1722, 0.0
  %v1727 = vmax.f32 %v1723, 0.0
  %v1728 = vmax.f32 %v1724, 0.0
  %v1729 = vmax.f32 %v1725, 0.0
  %1730 = vst.msk [vmem:[%s9] sm:$0xff] %vm51, %v1726
  %1731 = vst.msk [vmem:[%s9 + $0x8] sm:$0xff] %vm51, %v1727
  %1732 = vst.msk [vmem:[%s9 + $0x10] sm:$0xff] %vm51, %v1728
  %1733 = vst.msk [vmem:[%s9 + $0x18] sm:$0xff] %vm51, %v1729
  // Predicated region
  $region38: #{decoder_forward.1} parent=0 // pred_check
    _
  $region39: #{decoder_forward.1} parent=0 // pred_check_branch
    %1735 = sbr.rel (0) target = $region41
  $region40: #{decoder_forward.1} parent=0 // pred_region
    _
  $region41: #{decoder_forward.1} parent=0 // pred_fallthru
    _
  // Predicated region
  $region42: #{decoder_forward.1} parent=0 // pred_check
    _
  $region43: #{decoder_forward.1} parent=0 // pred_check_branch
    %1737 = sbr.rel (0) target = $region45
  $region44: #{decoder_forward.1} parent=0 // pred_region
    _
  $region45: #{decoder_forward.1} parent=0 // pred_fallthru
    _

</llo_original>
